<compile_context>
chip_gen: v6e
topology: v6e:2x2x1
jax: 0.10.0
libtpu: 0.0.40
codegen_flags: <defaults>
</compile_context>

<pallas_src>
import functools

import jax
import jax.numpy as jnp
from jax import lax
from jax.experimental import pallas as pl
from jax.experimental.pallas import tpu as pltpu


# ----------------------------- kernel ---------------------------------------


def _gnn_cell_kernel(
    a_ref, o_hidden_ref, hidden_ref,
    w_ein_ref, b_ein_ref, w_eout_ref, b_eout_ref,
    b_iah_ref, b_oah_ref,
    w_ih_ref, b_ih_ref, w_hh_ref, b_hh_ref, w_oh_ref, b_oh_ref,
    w_lin_ref, b_lin_ref,
    out_ref,
    *, num_steps,
):
    f32 = jnp.float32
    Bt, N, Hp = hidden_ref.shape
    BN = Bt * N
    cdt = w_ein_ref.dtype            # MXU operand dtype (f32 default, bf16 opt.)

    def bmm(a, b):                   # (Bt,N,K) @ (Bt,K,Hp) -> (Bt,N,Hp), f32 acc
        return lax.dot_general(a, b, (((2,), (1,)), ((0,), (0,))),
                               preferred_element_type=f32)

    # ---- step-invariant loads / compute, hoisted out of the step loop ----
    a_full = a_ref[...]                               # (Bt, N, 2N) — sliced in VMEM
    a_in = a_full[:, :, :N].astype(cdt)
    a_out = a_full[:, :, N:].astype(cdt)

    o_h = o_hidden_ref[...].reshape(BN, Hp)           # f32
    o_h_c = o_h.astype(cdt)

    b_ein = b_ein_ref[...]
    b_eout = b_eout_ref[...]
    b_iah = b_iah_ref[...]
    b_oah = b_oah_ref[...]
    b_ih = b_ih_ref[...]
    b_hh = b_hh_ref[...]

    # go gates and the o_hidden half of the output linear are constant over steps.
    go = jnp.dot(o_h_c, w_oh_ref[...], preferred_element_type=f32) + b_oh_ref[...]
    o_r, o_i, o_n = go[:, :Hp], go[:, Hp:2 * Hp], go[:, 2 * Hp:]
    out_from_o = (jnp.dot(o_h_c, w_lin_ref[Hp:2 * Hp, :], preferred_element_type=f32)
                  + b_lin_ref[...])

    def step_body(hidden):
        h_c = hidden.astype(cdt)
        # linear_edge_in / linear_edge_out, applied on the folded (Bt*N, Hp) slab
        eh_in = jnp.dot(h_c, w_ein_ref[...], preferred_element_type=f32) + b_ein
        eh_out = jnp.dot(h_c, w_eout_ref[...], preferred_element_type=f32) + b_eout
        # graph aggregation, batched over the Bt graphs of this block
        agg_in = bmm(a_in, eh_in.astype(cdt).reshape(Bt, N, Hp)).reshape(BN, Hp) + b_iah
        agg_out = bmm(a_out, eh_out.astype(cdt).reshape(Bt, N, Hp)).reshape(BN, Hp) + b_oah
        # gi = cat([agg_in, agg_out], -1) @ w_ih^T + b_ih   (concat split into 2 dots)
        gi = (jnp.dot(agg_in.astype(cdt), w_ih_ref[0:Hp, :], preferred_element_type=f32)
              + jnp.dot(agg_out.astype(cdt), w_ih_ref[Hp:2 * Hp, :],
                        preferred_element_type=f32)
              + b_ih)
        gh = jnp.dot(h_c, w_hh_ref[...], preferred_element_type=f32) + b_hh
        # 128-lane-tile aligned gate slices (Hp is a multiple of 128)
        i_r, i_i, i_n = gi[:, :Hp], gi[:, Hp:2 * Hp], gi[:, 2 * Hp:]
        h_r, h_i, h_n = gh[:, :Hp], gh[:, Hp:2 * Hp], gh[:, 2 * Hp:]
        resetgate = jax.nn.sigmoid(i_r + o_r + h_r)
        inputgate = jax.nn.sigmoid(i_i + o_i + h_i)
        newgate = jnp.tanh(i_n + o_n + resetgate * h_n)
        gnn_h = newgate + inputgate * (hidden - newgate)
        # output = cat([gnn_h, o_hidden], -1) @ w_linear^T + b_linear
        return (jnp.dot(gnn_h.astype(cdt), w_lin_ref[0:Hp, :],
                        preferred_element_type=f32)
                + out_from_o)

    hidden = hidden_ref[...].reshape(BN, Hp).astype(f32)
    if num_steps <= 4:                  # static unroll for small step counts
        for _ in range(num_steps):
            hidden = step_body(hidden)
    else:                               # keep hidden resident in VMEM across steps
        hidden = lax.fori_loop(0, num_steps, lambda _, h: step_body(h), hidden)

    out_ref[...] = hidden.reshape(Bt, N, Hp).astype(out_ref.dtype)


# ----------------------------- wrapper ---------------------------------------


def _round_up(x, m):
    return (x + m - 1) // m * m


def _pad_blocks(w, h, hp):
    """Zero-pad each (h x h) block of a (r*h, c*h) weight to (hp x hp)."""
    r, c = w.shape[0] // h, w.shape[1] // h
    w4 = w.reshape(r, h, c, h)
    w4 = jnp.pad(w4, ((0, 0), (0, hp - h), (0, 0), (0, hp - h)))
    return w4.reshape(r * hp, c * hp)


def _pad_bias(b, h, hp):
    """Zero-pad each h-chunk of a (c*h,) bias to hp, return shape (1, c*hp)."""
    c = b.shape[0] // h
    b2 = jnp.pad(b.reshape(c, h), ((0, 0), (0, hp - h)))
    return b2.reshape(1, c * hp)


def _pick_batch_tile(B, N, Hp, bytes_budget=8 << 20):
    """Largest divisor of B with Bt*N ~>= 256 rows that keeps blocks small."""
    target_bt = max(1, (256 + N - 1) // N)
    best = 1
    for d in range(1, B + 1):
        if B % d != 0 or d > target_bt:
            continue
        block_bytes = d * N * (2 * N + 3 * Hp) * 4   # A + hidden + o_hidden + out
        if block_bytes <= bytes_budget:
            best = d
    return best


def gnn_forward_pallas(A, o_hidden, hidden, params, step=1, mxu_dtype=jnp.float32):
    """Pallas implementation of GNN.forward.

    A: (B, N, 2N), hidden / o_hidden: (B, N, H).
    mxu_dtype: set to jnp.bfloat16 on v6e/v7x for faster MXU (f32 accumulation).
    """
    B, N, H = hidden.shape
    assert A.shape == (B, N, 2 * N)
    assert H % 8 == 0, "hidden_size must be a multiple of 8 (sublane tiling)"

    f32 = jnp.float32
    Hp = _round_up(H, 128)          # lane-dense feature dim
    wdt = mxu_dtype

    def pad_feat(x):
        return jnp.pad(x.astype(f32), ((0, 0), (0, 0), (0, Hp - H)))

    hidden_p = pad_feat(hidden)
    o_hidden_p = pad_feat(o_hidden)
    A_c = A.astype(wdt)

    # Pre-transposed, block-padded weights (glue). Biases stay f32.
    weight_args = (
        _pad_blocks(params["w_ein"].T, H, Hp).astype(wdt),
        _pad_bias(params["b_ein"], H, Hp),
        _pad_blocks(params["w_eout"].T, H, Hp).astype(wdt),
        _pad_bias(params["b_eout"], H, Hp),
        _pad_bias(params["b_iah"], H, Hp),
        _pad_bias(params["b_oah"], H, Hp),
        _pad_blocks(params["w_ih"].T, H, Hp).astype(wdt),      # (2Hp, 3Hp)
        _pad_bias(params["b_ih"], H, Hp),                       # (1, 3Hp)
        _pad_blocks(params["w_hh"].T, H, Hp).astype(wdt),       # (Hp, 3Hp)
        _pad_bias(params["b_hh"], H, Hp),
        _pad_blocks(params["w_oh"].T, H, Hp).astype(wdt),       # (Hp, 3Hp)
        _pad_bias(params["b_oh"], H, Hp),
        _pad_blocks(params["w_linear"].T, H, Hp).astype(wdt),   # (2Hp, Hp)
        _pad_bias(params["b_linear"], H, Hp),
    )

    Bt = _pick_batch_tile(B, N, Hp)
    grid = (B // Bt,)
    # TODO(synk): for very large N, add a grid axis tiling A along the
    # aggregation (column) dim with a VMEM accumulator to respect v7x's 64 MiB.

    def batch_spec(shape):
        nd = len(shape)
        return pl.BlockSpec((Bt,) + shape, lambda b: (b,) + (0,) * nd)

    def full_spec(arr):
        return pl.BlockSpec(arr.shape, lambda b: (0,) * arr.ndim)

    in_specs = [
        batch_spec((N, 2 * N)),    # A (whole; split into A_in/A_out in VMEM)
        batch_spec((N, Hp)),       # o_hidden
        batch_spec((N, Hp)),       # hidden
    ] + [full_spec(w) for w in weight_args]

    # Scheduling hint for XLA around the custom call.
    flops = 2 * step * B * N * (16 * Hp * Hp + 2 * N * Hp)
    wbytes = sum(int(w.size) * w.dtype.itemsize for w in weight_args)
    bytes_accessed = int(A_c.size * A_c.dtype.itemsize + 3 * B * N * Hp * 4 + wbytes)
    cost = pl.CostEstimate(flops=flops,
                           transcendentals=3 * step * B * N * Hp,
                           bytes_accessed=bytes_accessed)

    kernel = pl.pallas_call(
        functools.partial(_gnn_cell_kernel, num_steps=step),
        out_shape=jax.ShapeDtypeStruct((B, N, Hp), f32),
        grid=grid,
        in_specs=in_specs,
        out_specs=pl.BlockSpec((Bt, N, Hp), lambda b: (b, 0, 0)),
        compiler_params=pltpu.CompilerParams(
            dimension_semantics=("parallel",),
            vmem_limit_bytes=64 * 1024 * 1024,
        ),
        cost_estimate=cost,
    )
    out = kernel(A_c, o_hidden_p, hidden_p, *weight_args)
    return out[:, :, :H].astype(hidden.dtype)


# ----------------------------- pure-JAX reference -----------------------------


def gnn_forward_ref(A, o_hidden, hidden, params, step=1):
    """Pure-JAX reference (mirrors the PyTorch module exactly)."""
    N = A.shape[1]
    for _ in range(step):
        eh_in = hidden @ params["w_ein"].T + params["b_ein"]
        eh_out = hidden @ params["w_eout"].T + params["b_eout"]
        input_in = jnp.matmul(A[:, :, :N], eh_in) + params["b_iah"]
        input_out = jnp.matmul(A[:, :, N:2 * N], eh_out) + params["b_oah"]
        inputs = jnp.concatenate([input_in, input_out], axis=2)
        gi = inputs @ params["w_ih"].T + params["b_ih"]
        gh = hidden @ params["w_hh"].T + params["b_hh"]
        go = o_hidden @ params["w_oh"].T + params["b_oh"]
        i_r, i_i, i_n = jnp.split(gi, 3, axis=2)
        h_r, h_i, h_n = jnp.split(gh, 3, axis=2)
        o_r, o_i, o_n = jnp.split(go, 3, axis=2)
        resetgate = jax.nn.sigmoid(i_r + o_r + h_r)
        inputgate = jax.nn.sigmoid(i_i + o_i + h_i)
        newgate = jnp.tanh(i_n + o_n + resetgate * h_n)
        gnn_h = newgate + inputgate * (hidden - newgate)
        hidden = (jnp.concatenate([gnn_h, o_hidden], axis=2) @ params["w_linear"].T
                  + params["b_linear"])
    return hidden


def init_params(key, hidden_size):
    H = hidden_size
    ks = jax.random.split(key, 16)
    u = lambda k, shape: jax.random.uniform(k, shape, jnp.float32, -0.1, 0.1)
    return {
        "w_ih": u(ks[0], (3 * H, 2 * H)),
        "w_hh": u(ks[1], (3 * H, H)),
        "w_oh": u(ks[2], (3 * H, H)),
        "b_ih": u(ks[3], (3 * H,)),
        "b_hh": u(ks[4], (3 * H,)),
        "b_oh": u(ks[5], (3 * H,)),
        "b_iah": u(ks[6], (H,)),
        "b_oah": u(ks[7], (H,)),
        "w_ein": u(ks[8], (H, H)),
        "b_ein": u(ks[9], (H,)),
        "w_eout": u(ks[10], (H, H)),
        "b_eout": u(ks[11], (H,)),
        "w_linear": u(ks[12], (H, 2 * H)),
        "b_linear": u(ks[13], (H,)),
        # linear_edge_f is declared in __init__ but unused in forward; omitted.
    }


if __name__ == "__main__":
    B, N, H = 2, 8, 32

    key = jax.random.PRNGKey(0)
    k_p, k_a, k_h, k_o = jax.random.split(key, 4)

    params = init_params(k_p, H)
    A = jax.random.uniform(k_a, (B, N, 2 * N), jnp.float32)
    hidden = jax.random.normal(k_h, (B, N, H), jnp.float32)
    o_hidden = jax.random.normal(k_o, (B, N, H), jnp.float32)

    out = gnn_forward_pallas(A, o_hidden, hidden, params, step=1)
    out = jax.block_until_ready(out)
    ref = gnn_forward_ref(A, o_hidden, hidden, params, step=1)
    assert out.shape == (B, N, H)
    assert jnp.allclose(out, ref, atol=1e-4, rtol=1e-4), "step=1 mismatch vs reference"

    # Exercise the in-kernel multi-step path as well.
    out2 = jax.block_until_ready(gnn_forward_pallas(A, o_hidden, hidden, params, step=2))
    ref2 = gnn_forward_ref(A, o_hidden, hidden, params, step=2)
    assert jnp.allclose(out2, ref2, atol=2e-4, rtol=2e-4), "step=2 mismatch vs reference"

    print("KERNEL_OK")
</pallas_src>

<mosaic_0001>
module attributes {stable_mosaic.version = 11 : i64} {
  func.func @_gnn_cell_kernel(%arg0: i32, %arg1: memref<2x8x16xf32, #tpu.memory_space<vmem>>, %arg2: memref<2x8x128xf32, #tpu.memory_space<vmem>>, %arg3: memref<2x8x128xf32, #tpu.memory_space<vmem>>, %arg4: memref<128x128xf32, #tpu.memory_space<vmem>>, %arg5: memref<1x128xf32, #tpu.memory_space<vmem>>, %arg6: memref<128x128xf32, #tpu.memory_space<vmem>>, %arg7: memref<1x128xf32, #tpu.memory_space<vmem>>, %arg8: memref<1x128xf32, #tpu.memory_space<vmem>>, %arg9: memref<1x128xf32, #tpu.memory_space<vmem>>, %arg10: memref<256x384xf32, #tpu.memory_space<vmem>>, %arg11: memref<1x384xf32, #tpu.memory_space<vmem>>, %arg12: memref<128x384xf32, #tpu.memory_space<vmem>>, %arg13: memref<1x384xf32, #tpu.memory_space<vmem>>, %arg14: memref<128x384xf32, #tpu.memory_space<vmem>>, %arg15: memref<1x384xf32, #tpu.memory_space<vmem>>, %arg16: memref<256x128xf32, #tpu.memory_space<vmem>>, %arg17: memref<1x128xf32, #tpu.memory_space<vmem>>, %arg18: memref<2x8x128xf32, #tpu.memory_space<vmem>>) attributes {dimension_semantics = [#tpu.dimension_semantics<parallel>], iteration_bounds = array<i64: 1>, scalar_prefetch = 0 : i64, scratch_operands = 0 : i64, tpu.core_type = #tpu.core_type<tc>, window_params = [{transform_indices = @transform_0, window_bounds = array<i64: 2, 8, 16>}, {transform_indices = @transform_1, window_bounds = array<i64: 2, 8, 128>}, {transform_indices = @transform_2, window_bounds = array<i64: 2, 8, 128>}, {pipeline_mode = #tpu.pipeline_mode<synchronous>, transform_indices = @transform_3, window_bounds = array<i64: 128, 128>}, {pipeline_mode = #tpu.pipeline_mode<synchronous>, transform_indices = @transform_4, window_bounds = array<i64: 1, 128>}, {pipeline_mode = #tpu.pipeline_mode<synchronous>, transform_indices = @transform_5, window_bounds = array<i64: 128, 128>}, {pipeline_mode = #tpu.pipeline_mode<synchronous>, transform_indices = @transform_6, window_bounds = array<i64: 1, 128>}, {pipeline_mode = #tpu.pipeline_mode<synchronous>, transform_indices = @transform_7, window_bounds = array<i64: 1, 128>}, {pipeline_mode = #tpu.pipeline_mode<synchronous>, transform_indices = @transform_8, window_bounds = array<i64: 1, 128>}, {pipeline_mode = #tpu.pipeline_mode<synchronous>, transform_indices = @transform_9, window_bounds = array<i64: 256, 384>}, {pipeline_mode = #tpu.pipeline_mode<synchronous>, transform_indices = @transform_10, window_bounds = array<i64: 1, 384>}, {pipeline_mode = #tpu.pipeline_mode<synchronous>, transform_indices = @transform_11, window_bounds = array<i64: 128, 384>}, {pipeline_mode = #tpu.pipeline_mode<synchronous>, transform_indices = @transform_12, window_bounds = array<i64: 1, 384>}, {pipeline_mode = #tpu.pipeline_mode<synchronous>, transform_indices = @transform_13, window_bounds = array<i64: 128, 384>}, {pipeline_mode = #tpu.pipeline_mode<synchronous>, transform_indices = @transform_14, window_bounds = array<i64: 1, 384>}, {pipeline_mode = #tpu.pipeline_mode<synchronous>, transform_indices = @transform_15, window_bounds = array<i64: 256, 128>}, {pipeline_mode = #tpu.pipeline_mode<synchronous>, transform_indices = @transform_16, window_bounds = array<i64: 1, 128>}, {transform_indices = @transform_17, window_bounds = array<i64: 2, 8, 128>}]} {
    %c0 = arith.constant 0 : index
    %c0_0 = arith.constant 0 : index
    %c0_1 = arith.constant 0 : index
    %0 = vector.load %arg1[%c0, %c0_0, %c0_1] : memref<2x8x16xf32, #tpu.memory_space<vmem>>, vector<2x8x16xf32>
    %1 = vector.extract_strided_slice %0 {offsets = [0, 0, 0], sizes = [2, 8, 8], strides = [1, 1, 1]} : vector<2x8x16xf32> to vector<2x8x8xf32>
    %2 = vector.extract_strided_slice %0 {offsets = [0, 0, 8], sizes = [2, 8, 8], strides = [1, 1, 1]} : vector<2x8x16xf32> to vector<2x8x8xf32>
    %c0_2 = arith.constant 0 : index
    %c0_3 = arith.constant 0 : index
    %c0_4 = arith.constant 0 : index
    %3 = vector.load %arg2[%c0_2, %c0_3, %c0_4] : memref<2x8x128xf32, #tpu.memory_space<vmem>>, vector<2x8x128xf32>
    %4 = vector.shape_cast %3 : vector<2x8x128xf32> to vector<16x128xf32>
    %c0_5 = arith.constant 0 : index
    %c0_6 = arith.constant 0 : index
    %5 = vector.load %arg5[%c0_5, %c0_6] : memref<1x128xf32, #tpu.memory_space<vmem>>, vector<1x128xf32>
    %c0_7 = arith.constant 0 : index
    %c0_8 = arith.constant 0 : index
    %6 = vector.load %arg7[%c0_7, %c0_8] : memref<1x128xf32, #tpu.memory_space<vmem>>, vector<1x128xf32>
    %c0_9 = arith.constant 0 : index
    %c0_10 = arith.constant 0 : index
    %7 = vector.load %arg8[%c0_9, %c0_10] : memref<1x128xf32, #tpu.memory_space<vmem>>, vector<1x128xf32>
    %c0_11 = arith.constant 0 : index
    %c0_12 = arith.constant 0 : index
    %8 = vector.load %arg9[%c0_11, %c0_12] : memref<1x128xf32, #tpu.memory_space<vmem>>, vector<1x128xf32>
    %c0_13 = arith.constant 0 : index
    %c0_14 = arith.constant 0 : index
    %9 = vector.load %arg11[%c0_13, %c0_14] : memref<1x384xf32, #tpu.memory_space<vmem>>, vector<1x384xf32>
    %c0_15 = arith.constant 0 : index
    %c0_16 = arith.constant 0 : index
    %10 = vector.load %arg13[%c0_15, %c0_16] : memref<1x384xf32, #tpu.memory_space<vmem>>, vector<1x384xf32>
    %c0_17 = arith.constant 0 : index
    %c0_18 = arith.constant 0 : index
    %11 = vector.load %arg14[%c0_17, %c0_18] : memref<128x384xf32, #tpu.memory_space<vmem>>, vector<128x384xf32>
    %cst = arith.constant dense<0.000000e+00> : vector<16x384xf32>
    %12 = tpu.matmul %4, %11, %cst {dimension_numbers = #tpu.dot_dimension_numbers<[1], [0], [0], [1], [0, 0, 1, 1], [], []>} : vector<16x128xf32>, vector<128x384xf32>, vector<16x384xf32> -> vector<16x384xf32>
    %c0_19 = arith.constant 0 : index
    %c0_20 = arith.constant 0 : index
    %13 = vector.load %arg15[%c0_19, %c0_20] : memref<1x384xf32, #tpu.memory_space<vmem>>, vector<1x384xf32>
    %14 = vector.broadcast %13 : vector<1x384xf32> to vector<16x384xf32>
    %15 = arith.addf %12, %14 : vector<16x384xf32>
    %16 = vector.extract_strided_slice %15 {offsets = [0, 0], sizes = [16, 128], strides = [1, 1]} : vector<16x384xf32> to vector<16x128xf32>
    %17 = vector.extract_strided_slice %15 {offsets = [0, 128], sizes = [16, 128], strides = [1, 1]} : vector<16x384xf32> to vector<16x128xf32>
    %18 = vector.extract_strided_slice %15 {offsets = [0, 256], sizes = [16, 128], strides = [1, 1]} : vector<16x384xf32> to vector<16x128xf32>
    %c128 = arith.constant 128 : index
    %c0_21 = arith.constant 0 : index
    %19 = vector.load %arg16[%c128, %c0_21] : memref<256x128xf32, #tpu.memory_space<vmem>>, vector<128x128xf32>
    %cst_22 = arith.constant dense<0.000000e+00> : vector<16x128xf32>
    %20 = tpu.matmul %4, %19, %cst_22 {dimension_numbers = #tpu.dot_dimension_numbers<[1], [0], [0], [1], [0, 0, 1, 1], [], []>} : vector<16x128xf32>, vector<128x128xf32>, vector<16x128xf32> -> vector<16x128xf32>
    %c0_23 = arith.constant 0 : index
    %c0_24 = arith.constant 0 : index
    %21 = vector.load %arg17[%c0_23, %c0_24] : memref<1x128xf32, #tpu.memory_space<vmem>>, vector<1x128xf32>
    %22 = vector.broadcast %21 : vector<1x128xf32> to vector<16x128xf32>
    %23 = arith.addf %20, %22 : vector<16x128xf32>
    %c0_25 = arith.constant 0 : index
    %c0_26 = arith.constant 0 : index
    %c0_27 = arith.constant 0 : index
    %24 = vector.load %arg3[%c0_25, %c0_26, %c0_27] : memref<2x8x128xf32, #tpu.memory_space<vmem>>, vector<2x8x128xf32>
    %25 = vector.shape_cast %24 : vector<2x8x128xf32> to vector<16x128xf32>
    %c0_28 = arith.constant 0 : index
    %c0_29 = arith.constant 0 : index
    %26 = vector.load %arg4[%c0_28, %c0_29] : memref<128x128xf32, #tpu.memory_space<vmem>>, vector<128x128xf32>
    %cst_30 = arith.constant dense<0.000000e+00> : vector<16x128xf32>
    %27 = tpu.matmul %25, %26, %cst_30 {dimension_numbers = #tpu.dot_dimension_numbers<[1], [0], [0], [1], [0, 0, 1, 1], [], []>} : vector<16x128xf32>, vector<128x128xf32>, vector<16x128xf32> -> vector<16x128xf32>
    %28 = vector.broadcast %5 : vector<1x128xf32> to vector<16x128xf32>
    %29 = arith.addf %27, %28 : vector<16x128xf32>
    %c0_31 = arith.constant 0 : index
    %c0_32 = arith.constant 0 : index
    %30 = vector.load %arg6[%c0_31, %c0_32] : memref<128x128xf32, #tpu.memory_space<vmem>>, vector<128x128xf32>
    %cst_33 = arith.constant dense<0.000000e+00> : vector<16x128xf32>
    %31 = tpu.matmul %25, %30, %cst_33 {dimension_numbers = #tpu.dot_dimension_numbers<[1], [0], [0], [1], [0, 0, 1, 1], [], []>} : vector<16x128xf32>, vector<128x128xf32>, vector<16x128xf32> -> vector<16x128xf32>
    %32 = vector.broadcast %6 : vector<1x128xf32> to vector<16x128xf32>
    %33 = arith.addf %31, %32 : vector<16x128xf32>
    %34 = vector.shape_cast %29 : vector<16x128xf32> to vector<2x8x128xf32>
    %cst_34 = arith.constant dense<0.000000e+00> : vector<2x8x128xf32>
    %35 = tpu.matmul %1, %34, %cst_34 {dimension_numbers = #tpu.dot_dimension_numbers<[2], [1], [1], [2], [0, 0, 0, 1, 1, 2], [0], [0]>} : vector<2x8x8xf32>, vector<2x8x128xf32>, vector<2x8x128xf32> -> vector<2x8x128xf32>
    %36 = vector.shape_cast %35 : vector<2x8x128xf32> to vector<16x128xf32>
    %37 = vector.broadcast %7 : vector<1x128xf32> to vector<16x128xf32>
    %38 = arith.addf %36, %37 : vector<16x128xf32>
    %39 = vector.shape_cast %33 : vector<16x128xf32> to vector<2x8x128xf32>
    %cst_35 = arith.constant dense<0.000000e+00> : vector<2x8x128xf32>
    %40 = tpu.matmul %2, %39, %cst_35 {dimension_numbers = #tpu.dot_dimension_numbers<[2], [1], [1], [2], [0, 0, 0, 1, 1, 2], [0], [0]>} : vector<2x8x8xf32>, vector<2x8x128xf32>, vector<2x8x128xf32> -> vector<2x8x128xf32>
    %41 = vector.shape_cast %40 : vector<2x8x128xf32> to vector<16x128xf32>
    %42 = vector.broadcast %8 : vector<1x128xf32> to vector<16x128xf32>
    %43 = arith.addf %41, %42 : vector<16x128xf32>
    %c0_36 = arith.constant 0 : index
    %c0_37 = arith.constant 0 : index
    %44 = vector.load %arg10[%c0_36, %c0_37] : memref<256x384xf32, #tpu.memory_space<vmem>>, vector<128x384xf32>
    %cst_38 = arith.constant dense<0.000000e+00> : vector<16x384xf32>
    %45 = tpu.matmul %38, %44, %cst_38 {dimension_numbers = #tpu.dot_dimension_numbers<[1], [0], [0], [1], [0, 0, 1, 1], [], []>} : vector<16x128xf32>, vector<128x384xf32>, vector<16x384xf32> -> vector<16x384xf32>
    %c128_39 = arith.constant 128 : index
    %c0_40 = arith.constant 0 : index
    %46 = vector.load %arg10[%c128_39, %c0_40] : memref<256x384xf32, #tpu.memory_space<vmem>>, vector<128x384xf32>
    %cst_41 = arith.constant dense<0.000000e+00> : vector<16x384xf32>
    %47 = tpu.matmul %43, %46, %cst_41 {dimension_numbers = #tpu.dot_dimension_numbers<[1], [0], [0], [1], [0, 0, 1, 1], [], []>} : vector<16x128xf32>, vector<128x384xf32>, vector<16x384xf32> -> vector<16x384xf32>
    %48 = arith.addf %45, %47 : vector<16x384xf32>
    %49 = vector.broadcast %9 : vector<1x384xf32> to vector<16x384xf32>
    %50 = arith.addf %48, %49 : vector<16x384xf32>
    %c0_42 = arith.constant 0 : index
    %c0_43 = arith.constant 0 : index
    %51 = vector.load %arg12[%c0_42, %c0_43] : memref<128x384xf32, #tpu.memory_space<vmem>>, vector<128x384xf32>
    %cst_44 = arith.constant dense<0.000000e+00> : vector<16x384xf32>
    %52 = tpu.matmul %25, %51, %cst_44 {dimension_numbers = #tpu.dot_dimension_numbers<[1], [0], [0], [1], [0, 0, 1, 1], [], []>} : vector<16x128xf32>, vector<128x384xf32>, vector<16x384xf32> -> vector<16x384xf32>
    %53 = vector.broadcast %10 : vector<1x384xf32> to vector<16x384xf32>
    %54 = arith.addf %52, %53 : vector<16x384xf32>
    %55 = vector.extract_strided_slice %50 {offsets = [0, 0], sizes = [16, 128], strides = [1, 1]} : vector<16x384xf32> to vector<16x128xf32>
    %56 = vector.extract_strided_slice %50 {offsets = [0, 128], sizes = [16, 128], strides = [1, 1]} : vector<16x384xf32> to vector<16x128xf32>
    %57 = vector.extract_strided_slice %50 {offsets = [0, 256], sizes = [16, 128], strides = [1, 1]} : vector<16x384xf32> to vector<16x128xf32>
    %58 = vector.extract_strided_slice %54 {offsets = [0, 0], sizes = [16, 128], strides = [1, 1]} : vector<16x384xf32> to vector<16x128xf32>
    %59 = vector.extract_strided_slice %54 {offsets = [0, 128], sizes = [16, 128], strides = [1, 1]} : vector<16x384xf32> to vector<16x128xf32>
    %60 = vector.extract_strided_slice %54 {offsets = [0, 256], sizes = [16, 128], strides = [1, 1]} : vector<16x384xf32> to vector<16x128xf32>
    %61 = arith.addf %55, %16 : vector<16x128xf32>
    %62 = arith.addf %61, %58 : vector<16x128xf32>
    %63 = arith.negf %62 : vector<16x128xf32>
    %64 = math.exp %63 : vector<16x128xf32>
    %cst_45 = arith.constant 1.000000e+00 : f32
    %65 = vector.broadcast %cst_45 : f32 to vector<16x128xf32>
    %66 = arith.addf %65, %64 : vector<16x128xf32>
    %67 = arith.divf %65, %66 : vector<16x128xf32>
    %68 = arith.addf %56, %17 : vector<16x128xf32>
    %69 = arith.addf %68, %59 : vector<16x128xf32>
    %70 = arith.negf %69 : vector<16x128xf32>
    %71 = math.exp %70 : vector<16x128xf32>
    %cst_46 = arith.constant 1.000000e+00 : f32
    %72 = vector.broadcast %cst_46 : f32 to vector<16x128xf32>
    %73 = arith.addf %72, %71 : vector<16x128xf32>
    %74 = arith.divf %72, %73 : vector<16x128xf32>
    %75 = arith.addf %57, %18 : vector<16x128xf32>
    %76 = arith.mulf %67, %60 : vector<16x128xf32>
    %77 = arith.addf %75, %76 : vector<16x128xf32>
    %78 = math.tanh %77 : vector<16x128xf32>
    %79 = arith.subf %25, %78 : vector<16x128xf32>
    %80 = arith.mulf %74, %79 : vector<16x128xf32>
    %81 = arith.addf %78, %80 : vector<16x128xf32>
    %c0_47 = arith.constant 0 : index
    %c0_48 = arith.constant 0 : index
    %82 = vector.load %arg16[%c0_47, %c0_48] : memref<256x128xf32, #tpu.memory_space<vmem>>, vector<128x128xf32>
    %cst_49 = arith.constant dense<0.000000e+00> : vector<16x128xf32>
    %83 = tpu.matmul %81, %82, %cst_49 {dimension_numbers = #tpu.dot_dimension_numbers<[1], [0], [0], [1], [0, 0, 1, 1], [], []>} : vector<16x128xf32>, vector<128x128xf32>, vector<16x128xf32> -> vector<16x128xf32>
    %84 = arith.addf %83, %23 : vector<16x128xf32>
    %85 = vector.shape_cast %84 : vector<16x128xf32> to vector<2x8x128xf32>
    %c0_50 = arith.constant 0 : index
    %c0_51 = arith.constant 0 : index
    %c0_52 = arith.constant 0 : index
    %86 = vector.load %arg18[%c0_50, %c0_51, %c0_52] : memref<2x8x128xf32, #tpu.memory_space<vmem>>, vector<2x8x128xf32>
    tpu.vector_store %arg18[%c0_50, %c0_51, %c0_52], %85 {strides = array<i32>} : memref<2x8x128xf32, #tpu.memory_space<vmem>>, vector<2x8x128xf32>,
    return
  }
  func.func @transform_0(%arg0: i32) -> (i32, i32, i32) {
    %c0_i32 = arith.constant 0 : i32
    %c0_i32_0 = arith.constant 0 : i32
    %c0_i32_1 = arith.constant 0 : i32
    return %arg0, %c0_i32, %c0_i32_0 : i32, i32, i32
  }
  func.func @transform_1(%arg0: i32) -> (i32, i32, i32) {
    %c0_i32 = arith.constant 0 : i32
    %c0_i32_0 = arith.constant 0 : i32
    %c0_i32_1 = arith.constant 0 : i32
    return %arg0, %c0_i32, %c0_i32_0 : i32, i32, i32
  }
  func.func @transform_2(%arg0: i32) -> (i32, i32, i32) {
    %c0_i32 = arith.constant 0 : i32
    %c0_i32_0 = arith.constant 0 : i32
    %c0_i32_1 = arith.constant 0 : i32
    return %arg0, %c0_i32, %c0_i32_0 : i32, i32, i32
  }
  func.func @transform_3(%arg0: i32) -> (i32, i32) {
    %c0_i32 = arith.constant 0 : i32
    %c0_i32_0 = arith.constant 0 : i32
    %c0_i32_1 = arith.constant 0 : i32
    return %c0_i32, %c0_i32_0 : i32, i32
  }
  func.func @transform_4(%arg0: i32) -> (i32, i32) {
    %c0_i32 = arith.constant 0 : i32
    %c0_i32_0 = arith.constant 0 : i32
    %c0_i32_1 = arith.constant 0 : i32
    return %c0_i32, %c0_i32_0 : i32, i32
  }
  func.func @transform_5(%arg0: i32) -> (i32, i32) {
    %c0_i32 = arith.constant 0 : i32
    %c0_i32_0 = arith.constant 0 : i32
    %c0_i32_1 = arith.constant 0 : i32
    return %c0_i32, %c0_i32_0 : i32, i32
  }
  func.func @transform_6(%arg0: i32) -> (i32, i32) {
    %c0_i32 = arith.constant 0 : i32
    %c0_i32_0 = arith.constant 0 : i32
    %c0_i32_1 = arith.constant 0 : i32
    return %c0_i32, %c0_i32_0 : i32, i32
  }
  func.func @transform_7(%arg0: i32) -> (i32, i32) {
    %c0_i32 = arith.constant 0 : i32
    %c0_i32_0 = arith.constant 0 : i32
    %c0_i32_1 = arith.constant 0 : i32
    return %c0_i32, %c0_i32_0 : i32, i32
  }
  func.func @transform_8(%arg0: i32) -> (i32, i32) {
    %c0_i32 = arith.constant 0 : i32
    %c0_i32_0 = arith.constant 0 : i32
    %c0_i32_1 = arith.constant 0 : i32
    return %c0_i32, %c0_i32_0 : i32, i32
  }
  func.func @transform_9(%arg0: i32) -> (i32, i32) {
    %c0_i32 = arith.constant 0 : i32
    %c0_i32_0 = arith.constant 0 : i32
    %c0_i32_1 = arith.constant 0 : i32
    return %c0_i32, %c0_i32_0 : i32, i32
  }
  func.func @transform_10(%arg0: i32) -> (i32, i32) {
    %c0_i32 = arith.constant 0 : i32
    %c0_i32_0 = arith.constant 0 : i32
    %c0_i32_1 = arith.constant 0 : i32
    return %c0_i32, %c0_i32_0 : i32, i32
  }
  func.func @transform_11(%arg0: i32) -> (i32, i32) {
    %c0_i32 = arith.constant 0 : i32
    %c0_i32_0 = arith.constant 0 : i32
    %c0_i32_1 = arith.constant 0 : i32
    return %c0_i32, %c0_i32_0 : i32, i32
  }
  func.func @transform_12(%arg0: i32) -> (i32, i32) {
    %c0_i32 = arith.constant 0 : i32
    %c0_i32_0 = arith.constant 0 : i32
    %c0_i32_1 = arith.constant 0 : i32
    return %c0_i32, %c0_i32_0 : i32, i32
  }
  func.func @transform_13(%arg0: i32) -> (i32, i32) {
    %c0_i32 = arith.constant 0 : i32
    %c0_i32_0 = arith.constant 0 : i32
    %c0_i32_1 = arith.constant 0 : i32
    return %c0_i32, %c0_i32_0 : i32, i32
  }
  func.func @transform_14(%arg0: i32) -> (i32, i32) {
    %c0_i32 = arith.constant 0 : i32
    %c0_i32_0 = arith.constant 0 : i32
    %c0_i32_1 = arith.constant 0 : i32
    return %c0_i32, %c0_i32_0 : i32, i32
  }
  func.func @transform_15(%arg0: i32) -> (i32, i32) {
    %c0_i32 = arith.constant 0 : i32
    %c0_i32_0 = arith.constant 0 : i32
    %c0_i32_1 = arith.constant 0 : i32
    return %c0_i32, %c0_i32_0 : i32, i32
  }
  func.func @transform_16(%arg0: i32) -> (i32, i32) {
    %c0_i32 = arith.constant 0 : i32
    %c0_i32_0 = arith.constant 0 : i32
    %c0_i32_1 = arith.constant 0 : i32
    return %c0_i32, %c0_i32_0 : i32, i32
  }
  func.func @transform_17(%arg0: i32) -> (i32, i32, i32) {
    %c0_i32 = arith.constant 0 : i32
    %c0_i32_0 = arith.constant 0 : i32
    %c0_i32_1 = arith.constant 0 : i32
    return %arg0, %c0_i32, %c0_i32_0 : i32, i32, i32
  }
}

</mosaic_0001>

<llo_original>
// kernel: tpu_custom_call.1
$region0: #{tpu_custom_call.1}
  #allocation0 [shape = 'u32[]', space=smem, size = 0x4, offset = 0x4, fixed_abs, tag = 'smem constant byte address 0x4 - core index']
  #allocation1 [shape = 'u32[144,128]{1,0:T(1,128)}', space=vmem, size = 0x12000, scoped, tag = 'internal scratch']
  %s0 = inlined_call_operand.hbm [shape: f32[2,8,16], index: 0, kind: input, shape index: {}]
  %s1 = inlined_call_operand.hbm [shape: f32[2,8,128], index: 1, kind: input, shape index: {}]
  %s2 = inlined_call_operand.hbm [shape: f32[2,8,128], index: 2, kind: input, shape index: {}]
  %s3 = inlined_call_operand.hbm [shape: f32[128,128], index: 3, kind: input, shape index: {}]
  %s4 = inlined_call_operand.hbm [shape: f32[1,128], index: 4, kind: input, shape index: {}]
  %s5 = inlined_call_operand.hbm [shape: f32[128,128], index: 5, kind: input, shape index: {}]
  %s6 = inlined_call_operand.vmem [shape: f32[1,128], index: 6, kind: input, shape index: {}]
  %s7 = inlined_call_operand.vmem [shape: f32[1,128], index: 7, kind: input, shape index: {}]
  %s8 = inlined_call_operand.vmem [shape: f32[1,128], index: 8, kind: input, shape index: {}]
  %s9 = inlined_call_operand.hbm [shape: f32[256,384], index: 9, kind: input, shape index: {}]
  %s10 = inlined_call_operand.vmem [shape: f32[1,384], index: 10, kind: input, shape index: {}]
  %s11 = inlined_call_operand.hbm [shape: f32[128,384], index: 11, kind: input, shape index: {}]
  %s12 = inlined_call_operand.vmem [shape: f32[1,384], index: 12, kind: input, shape index: {}]
  %s13 = inlined_call_operand.hbm [shape: f32[128,384], index: 13, kind: input, shape index: {}]
  %s14 = inlined_call_operand.vmem [shape: f32[1,384], index: 14, kind: input, shape index: {}]
  %s15 = inlined_call_operand.hbm [shape: f32[256,128], index: 15, kind: input, shape index: {}]
  %s16 = inlined_call_operand.vmem [shape: f32[1,128], index: 16, kind: input, shape index: {}]
  %s17 = inlined_call_operand.hbm [shape: f32[2,8,128], index: 17, kind: output, shape index: {}]
  %s18 = sld [smem:[#allocation0]]
  $region118: #{tpu_custom_call.1} parent=0
    _
  %s20 = ssub.s32 1, %s18
  %s21 = scalar_select 0, %s20, %s18
  $region1: #{tpu_custom_call.1} parent=0
    #allocation2 [shape = 'u8[8192]{0}', space=vmem, size = 0x2000, scoped, tag = 'input window, operand 0, single buffered']
    #allocation3 [shape = 's32[1]{0}', space=sflag, size = 0x4, scoped, tag = 'scoped memory for tpu_custom_call.1']
    #allocation4 [shape = 's32[1]{0}', space=sflag, size = 0x4, scoped, tag = 'scoped memory for tpu_custom_call.1']
    #allocation5 [shape = 'u8[8192]{0}', space=vmem, size = 0x2000, scoped, tag = 'input window, operand 1, single buffered']
    #allocation6 [shape = 's32[1]{0}', space=sflag, size = 0x4, scoped, tag = 'scoped memory for tpu_custom_call.1']
    #allocation7 [shape = 'u8[8192]{0}', space=vmem, size = 0x2000, scoped, tag = 'input window, operand 2, single buffered']
    #allocation8 [shape = 'u8[65536]{0}', space=vmem, size = 0x10000, scoped, tag = 'input window, operand 3, single buffered']
    #allocation9 [shape = 's32[1]{0}', space=sflag, size = 0x4, scoped, tag = 'scoped memory for tpu_custom_call.1']
    #allocation10 [shape = 'u8[512]{0}', space=vmem, size = 0x400, scoped, tag = 'input window, operand 4, single buffered']
    #allocation11 [shape = 'u8[65536]{0}', space=vmem, size = 0x10000, scoped, tag = 'input window, operand 5, single buffered']
    #allocation12 [shape = 's32[1]{0}', space=sflag, size = 0x4, scoped, tag = 'scoped memory for tpu_custom_call.1']
    #allocation13 [shape = 'u8[393216]{0}', space=vmem, size = 0x60000, scoped, tag = 'input window, operand 9, single buffered']
    #allocation14 [shape = 'u8[196608]{0}', space=vmem, size = 0x30000, scoped, tag = 'input window, operand 11, single buffered']
    #allocation15 [shape = 's32[1]{0}', space=sflag, size = 0x4, scoped, tag = 'scoped memory for tpu_custom_call.1']
    #allocation16 [shape = 'u8[196608]{0}', space=vmem, size = 0x30000, scoped, tag = 'input window, operand 13, single buffered']
    #allocation17 [shape = 'u8[131072]{0}', space=vmem, size = 0x20000, scoped, tag = 'input window, operand 15, single buffered']
    #allocation18 [shape = 's32[1]{0}', space=sflag, size = 0x4, scoped, tag = 'scoped memory for tpu_custom_call.1']
    #allocation19 [shape = 'u8[8192]{0}', space=vmem, size = 0x2000, scoped, tag = 'output window, operand 0, single buffered']
    %22 = vsyncpa [#allocation3], 0
    %23 = vsyncpa [#allocation6], 0
    %24 = vsyncpa [#allocation9], 0
    %25 = vsyncpa [#allocation12], 0
    %26 = vsyncpa [#allocation15], 0
    %27 = vsyncpa [#allocation18], 0
    %28 = vsyncpa [#allocation4], 0
    // Predicated region
    $region2: #{tpu_custom_call.1} parent=1 // pred_check
      _
    $region3: #{tpu_custom_call.1} parent=1 // pred_check_branch
      %30 = sbr.rel (0) target = $region5
    $region4: #{tpu_custom_call.1} parent=1 // pred_region
      %s32 = ssub.s32 256, 256
      %33 = vsyncadd [#allocation3], %s32
      %s34 = sshll.u32 [#allocation2], 4
      %s35 = int_to_ptr.vmem [resolvable:$true] %s34
      %40 = dma.hbm_to_vmem [thread:$0]  %s0, 256, %s35, [#allocation3], 128, 128, 8
    $region5: #{tpu_custom_call.1} parent=1 // pred_fallthru
      _
    // Predicated region
    $region6: #{tpu_custom_call.1} parent=1 // pred_check
      _
    $region7: #{tpu_custom_call.1} parent=1 // pred_check_branch
      %42 = sbr.rel (0) target = $region9
    $region8: #{tpu_custom_call.1} parent=1 // pred_region
      %s44 = ssub.s32 256, 256
      %45 = vsyncadd [#allocation6], %s44
      %s46 = sshll.u32 [#allocation5], 4
      %s47 = int_to_ptr.vmem [resolvable:$true] %s46
      %52 = dma.hbm_to_vmem [thread:$0]  %s1, 256, %s47, [#allocation6], 128, 128, 8
    $region9: #{tpu_custom_call.1} parent=1 // pred_fallthru
      _
    // Predicated region
    $region10: #{tpu_custom_call.1} parent=1 // pred_check
      _
    $region11: #{tpu_custom_call.1} parent=1 // pred_check_branch
      %54 = sbr.rel (0) target = $region13
    $region12: #{tpu_custom_call.1} parent=1 // pred_region
      %s56 = ssub.s32 256, 256
      %57 = vsyncadd [#allocation6], %s56
      %s58 = sshll.u32 [#allocation7], 4
      %s59 = int_to_ptr.vmem [resolvable:$true] %s58
      %64 = dma.hbm_to_vmem [thread:$0]  %s2, 256, %s59, [#allocation6], 128, 128, 8
    $region13: #{tpu_custom_call.1} parent=1 // pred_fallthru
      _
    // Predicated region
    $region14: #{tpu_custom_call.1} parent=1 // pred_check
      _
    $region15: #{tpu_custom_call.1} parent=1 // pred_check_branch
      %66 = sbr.rel (0) target = $region17
    $region16: #{tpu_custom_call.1} parent=1 // pred_region
      %s68 = ssub.s32 2048, 2048
      %69 = vsyncadd [#allocation9], %s68
      %s70 = sshll.u32 [#allocation8], 4
      %s71 = int_to_ptr.vmem [resolvable:$true] %s70
      %76 = dma.hbm_to_vmem [thread:$0]  %s3, 2048, %s71, [#allocation9], 128, 128, 8
    $region17: #{tpu_custom_call.1} parent=1 // pred_fallthru
      _
    // Predicated region
    $region18: #{tpu_custom_call.1} parent=1 // pred_check
      _
    $region19: #{tpu_custom_call.1} parent=1 // pred_check_branch
      %78 = sbr.rel (0) target = $region21
    $region20: #{tpu_custom_call.1} parent=1 // pred_region
      %s80 = ssub.s32 16, 16
      %81 = vsyncadd [#allocation9], %s80
      %s83 = sshll.u32 [#allocation10], 4
      %s84 = int_to_ptr.vmem [resolvable:$true] %s83
      %86 = dma.hbm_to_vmem [thread:$0]  %s4, 16, %s84, [#allocation9]
    $region21: #{tpu_custom_call.1} parent=1 // pred_fallthru
      _
    // Predicated region
    $region22: #{tpu_custom_call.1} parent=1 // pred_check
      _
    $region23: #{tpu_custom_call.1} parent=1 // pred_check_branch
      %88 = sbr.rel (0) target = $region25
    $region24: #{tpu_custom_call.1} parent=1 // pred_region
      %s90 = ssub.s32 2048, 2048
      %91 = vsyncadd [#allocation12], %s90
      %s92 = sshll.u32 [#allocation11], 4
      %s93 = int_to_ptr.vmem [resolvable:$true] %s92
      %98 = dma.hbm_to_vmem [thread:$0]  %s5, 2048, %s93, [#allocation12], 128, 128, 8
    $region25: #{tpu_custom_call.1} parent=1 // pred_fallthru
      _
    // Predicated region
    $region26: #{tpu_custom_call.1} parent=1 // pred_check
      _
    $region27: #{tpu_custom_call.1} parent=1 // pred_check_branch
      %100 = sbr.rel (0) target = $region29
    $region28: #{tpu_custom_call.1} parent=1 // pred_region
      _
    $region29: #{tpu_custom_call.1} parent=1 // pred_fallthru
      _
    // Predicated region
    $region30: #{tpu_custom_call.1} parent=1 // pred_check
      _
    $region31: #{tpu_custom_call.1} parent=1 // pred_check_branch
      %102 = sbr.rel (0) target = $region33
    $region32: #{tpu_custom_call.1} parent=1 // pred_region
      _
    $region33: #{tpu_custom_call.1} parent=1 // pred_fallthru
      _
    // Predicated region
    $region34: #{tpu_custom_call.1} parent=1 // pred_check
      _
    $region35: #{tpu_custom_call.1} parent=1 // pred_check_branch
      %104 = sbr.rel (0) target = $region37
    $region36: #{tpu_custom_call.1} parent=1 // pred_region
      _
    $region37: #{tpu_custom_call.1} parent=1 // pred_fallthru
      _
    // Predicated region
    $region38: #{tpu_custom_call.1} parent=1 // pred_check
      _
    $region39: #{tpu_custom_call.1} parent=1 // pred_check_branch
      %106 = sbr.rel (0) target = $region41
    $region40: #{tpu_custom_call.1} parent=1 // pred_region
      %s108 = ssub.s32 12288, 12288
      %109 = vsyncadd [#allocation12], %s108
      %s110 = sshll.u32 [#allocation13], 4
      %s111 = int_to_ptr.vmem [resolvable:$true] %s110
      %116 = dma.hbm_to_vmem [thread:$0]  %s9, 12288, %s111, [#allocation12], 384, 384, 24
    $region41: #{tpu_custom_call.1} parent=1 // pred_fallthru
      _
    // Predicated region
    $region42: #{tpu_custom_call.1} parent=1 // pred_check
      _
    $region43: #{tpu_custom_call.1} parent=1 // pred_check_branch
      %118 = sbr.rel (0) target = $region45
    $region44: #{tpu_custom_call.1} parent=1 // pred_region
      _
    $region45: #{tpu_custom_call.1} parent=1 // pred_fallthru
      _
    // Predicated region
    $region46: #{tpu_custom_call.1} parent=1 // pred_check
      _
    $region47: #{tpu_custom_call.1} parent=1 // pred_check_branch
      %120 = sbr.rel (0) target = $region49
    $region48: #{tpu_custom_call.1} parent=1 // pred_region
      %s122 = ssub.s32 6144, 6144
      %123 = vsyncadd [#allocation15], %s122
      %s124 = sshll.u32 [#allocation14], 4
      %s125 = int_to_ptr.vmem [resolvable:$true] %s124
      %130 = dma.hbm_to_vmem [thread:$0]  %s11, 6144, %s125, [#allocation15], 384, 384, 24
    $region49: #{tpu_custom_call.1} parent=1 // pred_fallthru
      _
    // Predicated region
    $region50: #{tpu_custom_call.1} parent=1 // pred_check
      _
    $region51: #{tpu_custom_call.1} parent=1 // pred_check_branch
      %132 = sbr.rel (0) target = $region53
    $region52: #{tpu_custom_call.1} parent=1 // pred_region
      _
    $region53: #{tpu_custom_call.1} parent=1 // pred_fallthru
      _
    // Predicated region
    $region54: #{tpu_custom_call.1} parent=1 // pred_check
      _
    $region55: #{tpu_custom_call.1} parent=1 // pred_check_branch
      %134 = sbr.rel (0) target = $region57
    $region56: #{tpu_custom_call.1} parent=1 // pred_region
      %s136 = ssub.s32 6144, 6144
      %137 = vsyncadd [#allocation15], %s136
      %s138 = sshll.u32 [#allocation16], 4
      %s139 = int_to_ptr.vmem [resolvable:$true] %s138
      %144 = dma.hbm_to_vmem [thread:$0]  %s13, 6144, %s139, [#allocation15], 384, 384, 24
    $region57: #{tpu_custom_call.1} parent=1 // pred_fallthru
      _
    // Predicated region
    $region58: #{tpu_custom_call.1} parent=1 // pred_check
      _
    $region59: #{tpu_custom_call.1} parent=1 // pred_check_branch
      %146 = sbr.rel (0) target = $region61
    $region60: #{tpu_custom_call.1} parent=1 // pred_region
      _
    $region61: #{tpu_custom_call.1} parent=1 // pred_fallthru
      _
    // Predicated region
    $region62: #{tpu_custom_call.1} parent=1 // pred_check
      _
    $region63: #{tpu_custom_call.1} parent=1 // pred_check_branch
      %148 = sbr.rel (0) target = $region65
    $region64: #{tpu_custom_call.1} parent=1 // pred_region
      %s150 = ssub.s32 4096, 4096
      %151 = vsyncadd [#allocation18], %s150
      %s152 = sshll.u32 [#allocation17], 4
      %s153 = int_to_ptr.vmem [resolvable:$true] %s152
      %158 = dma.hbm_to_vmem [thread:$0]  %s15, 4096, %s153, [#allocation18], 128, 128, 8
    $region65: #{tpu_custom_call.1} parent=1 // pred_fallthru
      _
    // Predicated region
    $region66: #{tpu_custom_call.1} parent=1 // pred_check
      _
    $region67: #{tpu_custom_call.1} parent=1 // pred_check_branch
      %160 = sbr.rel (0) target = $region69
    $region68: #{tpu_custom_call.1} parent=1 // pred_region
      _
    $region69: #{tpu_custom_call.1} parent=1 // pred_fallthru
      _
    // Predicated region
    $region70: #{tpu_custom_call.1} parent=1 // pred_check
      _
    $region71: #{tpu_custom_call.1} parent=1 // pred_check_branch
      %162 = sbr.rel (0) target = $region73
    $region72: #{tpu_custom_call.1} parent=1 // pred_region
      %163 = dma.done [#allocation3], 256
    $region73: #{tpu_custom_call.1} parent=1 // pred_fallthru
      _
    // Predicated region
    $region74: #{tpu_custom_call.1} parent=1 // pred_check
      _
    $region75: #{tpu_custom_call.1} parent=1 // pred_check_branch
      %165 = sbr.rel (0) target = $region77
    $region76: #{tpu_custom_call.1} parent=1 // pred_region
      %166 = dma.done [#allocation6], 256
    $region77: #{tpu_custom_call.1} parent=1 // pred_fallthru
      _
    // Predicated region
    $region78: #{tpu_custom_call.1} parent=1 // pred_check
      _
    $region79: #{tpu_custom_call.1} parent=1 // pred_check_branch
      %168 = sbr.rel (0) target = $region81
    $region80: #{tpu_custom_call.1} parent=1 // pred_region
      %169 = dma.done [#allocation6], 256
    $region81: #{tpu_custom_call.1} parent=1 // pred_fallthru
      _
    // Predicated region
    $region82: #{tpu_custom_call.1} parent=1 // pred_check
      _
    $region83: #{tpu_custom_call.1} parent=1 // pred_check_branch
      %171 = sbr.rel (0) target = $region85
    $region84: #{tpu_custom_call.1} parent=1 // pred_region
      %172 = dma.done [#allocation9], 2048
    $region85: #{tpu_custom_call.1} parent=1 // pred_fallthru
      _
    // Predicated region
    $region86: #{tpu_custom_call.1} parent=1 // pred_check
      _
    $region87: #{tpu_custom_call.1} parent=1 // pred_check_branch
      %174 = sbr.rel (0) target = $region89
    $region88: #{tpu_custom_call.1} parent=1 // pred_region
      %175 = dma.done [#allocation9], 16
    $region89: #{tpu_custom_call.1} parent=1 // pred_fallthru
      _
    // Predicated region
    $region90: #{tpu_custom_call.1} parent=1 // pred_check
      _
    $region91: #{tpu_custom_call.1} parent=1 // pred_check_branch
      %177 = sbr.rel (0) target = $region93
    $region92: #{tpu_custom_call.1} parent=1 // pred_region
      %178 = dma.done [#allocation12], 2048
    $region93: #{tpu_custom_call.1} parent=1 // pred_fallthru
      _
    // Predicated region
    $region94: #{tpu_custom_call.1} parent=1 // pred_check
      _
    $region95: #{tpu_custom_call.1} parent=1 // pred_check_branch
      %180 = sbr.rel (0) target = $region97
    $region96: #{tpu_custom_call.1} parent=1 // pred_region
      %181 = dma.done [#allocation12], 12288
    $region97: #{tpu_custom_call.1} parent=1 // pred_fallthru
      _
    // Predicated region
    $region98: #{tpu_custom_call.1} parent=1 // pred_check
      _
    $region99: #{tpu_custom_call.1} parent=1 // pred_check_branch
      %183 = sbr.rel (0) target = $region101
    $region100: #{tpu_custom_call.1} parent=1 // pred_region
      %184 = dma.done [#allocation15], 6144
    $region101: #{tpu_custom_call.1} parent=1 // pred_fallthru
      _
    // Predicated region
    $region102: #{tpu_custom_call.1} parent=1 // pred_check
      _
    $region103: #{tpu_custom_call.1} parent=1 // pred_check_branch
      %186 = sbr.rel (0) target = $region105
    $region104: #{tpu_custom_call.1} parent=1 // pred_region
      %187 = dma.done [#allocation15], 6144
    $region105: #{tpu_custom_call.1} parent=1 // pred_fallthru
      _
    // Predicated region
    $region106: #{tpu_custom_call.1} parent=1 // pred_check
      _
    $region107: #{tpu_custom_call.1} parent=1 // pred_check_branch
      %189 = sbr.rel (0) target = $region109
    $region108: #{tpu_custom_call.1} parent=1 // pred_region
      %190 = dma.done [#allocation18], 4096
    $region109: #{tpu_custom_call.1} parent=1 // pred_fallthru
      _
    %v191 = vld [vmem:[#allocation2] sm:$0xff]
    %v192 = vld [vmem:[#allocation2 + $0x8] sm:$0xff]
    %v193 = vld [vmem:[#allocation5] sm:$0xff]
    %v194 = vld [vmem:[#allocation5 + $0x8] sm:$0xff]
    %v195 = vld [vmem:[#allocation10] sm:$0x1]
    %v196 = vld [vmem:[%s6] sm:$0x1]
    %v197 = vld [vmem:[%s7] sm:$0x1]
    %v198 = vld [vmem:[%s8] sm:$0x1]
    %v199 = vld [vmem:[%s10] sm:$0x7]
    %v200 = vld [vmem:[%s12] sm:$0x7]
    %v201 = vld [vmem:[#allocation16] sm:$0xff]
    %v202 = vld [vmem:[#allocation16 + $0x8] sm:$0xff]
    %v203 = vld [vmem:[#allocation16 + $0x10] sm:$0xff]
    %v204 = vld [vmem:[#allocation16 + $0x18] sm:$0xff]
    %v205 = vld [vmem:[#allocation16 + $0x20] sm:$0xff]
    %v206 = vld [vmem:[#allocation16 + $0x28] sm:$0xff]
    %v207 = vld [vmem:[#allocation16 + $0x30] sm:$0xff]
    %v208 = vld [vmem:[#allocation16 + $0x38] sm:$0xff]
    %v209 = vld [vmem:[#allocation16 + $0x40] sm:$0xff]
    %v210 = vld [vmem:[#allocation16 + $0x48] sm:$0xff]
    %v211 = vld [vmem:[#allocation16 + $0x50] sm:$0xff]
    %v212 = vld [vmem:[#allocation16 + $0x58] sm:$0xff]
    %v213 = vld [vmem:[#allocation16 + $0x60] sm:$0xff]
    %v214 = vld [vmem:[#allocation16 + $0x68] sm:$0xff]
    %v215 = vld [vmem:[#allocation16 + $0x70] sm:$0xff]
    %v216 = vld [vmem:[#allocation16 + $0x78] sm:$0xff]
    %v217 = vld [vmem:[#allocation16 + $0x80] sm:$0xff]
    %v218 = vld [vmem:[#allocation16 + $0x88] sm:$0xff]
    %v219 = vld [vmem:[#allocation16 + $0x90] sm:$0xff]
    %v220 = vld [vmem:[#allocation16 + $0x98] sm:$0xff]
    %v221 = vld [vmem:[#allocation16 + $0xa0] sm:$0xff]
    %v222 = vld [vmem:[#allocation16 + $0xa8] sm:$0xff]
    %v223 = vld [vmem:[#allocation16 + $0xb0] sm:$0xff]
    %v224 = vld [vmem:[#allocation16 + $0xb8] sm:$0xff]
    %v225 = vld [vmem:[#allocation16 + $0xc0] sm:$0xff]
    %v226 = vld [vmem:[#allocation16 + $0xc8] sm:$0xff]
    %v227 = vld [vmem:[#allocation16 + $0xd0] sm:$0xff]
    %v228 = vld [vmem:[#allocation16 + $0xd8] sm:$0xff]
    %v229 = vld [vmem:[#allocation16 + $0xe0] sm:$0xff]
    %v230 = vld [vmem:[#allocation16 + $0xe8] sm:$0xff]
    %v231 = vld [vmem:[#allocation16 + $0xf0] sm:$0xff]
    %v232 = vld [vmem:[#allocation16 + $0xf8] sm:$0xff]
    %v233 = vld [vmem:[#allocation16 + $0x100] sm:$0xff]
    %v234 = vld [vmem:[#allocation16 + $0x108] sm:$0xff]
    %v235 = vld [vmem:[#allocation16 + $0x110] sm:$0xff]
    %v236 = vld [vmem:[#allocation16 + $0x118] sm:$0xff]
    %v237 = vld [vmem:[#allocation16 + $0x120] sm:$0xff]
    %v238 = vld [vmem:[#allocation16 + $0x128] sm:$0xff]
    %v239 = vld [vmem:[#allocation16 + $0x130] sm:$0xff]
    %v240 = vld [vmem:[#allocation16 + $0x138] sm:$0xff]
    %v241 = vld [vmem:[#allocation16 + $0x140] sm:$0xff]
    %v242 = vld [vmem:[#allocation16 + $0x148] sm:$0xff]
    %v243 = vld [vmem:[#allocation16 + $0x150] sm:$0xff]
    %v244 = vld [vmem:[#allocation16 + $0x158] sm:$0xff]
    %v245 = vld [vmem:[#allocation16 + $0x160] sm:$0xff]
    %v246 = vld [vmem:[#allocation16 + $0x168] sm:$0xff]
    %v247 = vld [vmem:[#allocation16 + $0x170] sm:$0xff]
    %v248 = vld [vmem:[#allocation16 + $0x178] sm:$0xff]
    %v249 = vld [vmem:[%s14] sm:$0x7]
    %v251 = vlaneseq
    %v252 = vshrl.u32 %v251, 7
    %v253 = vsub.s32 0, %v252
    %v254 = vrot.slane %v249, %v253
    %v255 = vlaneseq
    %v256 = vshrl.u32 %v255, 7
    %v257 = vsub.s32 1, %v256
    %v258 = vrot.slane %v249, %v257
    %v259 = vlaneseq
    %v260 = vshrl.u32 %v259, 7
    %v261 = vsub.s32 2, %v260
    %v262 = vrot.slane %v249, %v261
    %266 = vmatprep.subr.mxu0 %v247
    %267 = vmatpush1.msra.mxu0 %v246
    %268 = vmatprep.subr.mxu0 %v244
    %269 = vmatpush1.msra.mxu0 %v243
    %270 = vmatprep.subr.mxu0 %v241
    %271 = vmatpush1.msra.mxu0 %v240
    %272 = vmatprep.subr.mxu0 %v238
    %273 = vmatpush1.msra.mxu0 %v237
    %274 = vmatprep.subr.mxu0 %v235
    %275 = vmatpush1.msra.mxu0 %v234
    %276 = vmatprep.subr.mxu0 %v232
    %277 = vmatpush1.msra.mxu0 %v231
    %278 = vmatprep.subr.mxu0 %v229
    %279 = vmatpush1.msra.mxu0 %v228
    %280 = vmatprep.subr.mxu0 %v226
    %281 = vmatpush1.msra.mxu0 %v225
    %282 = vmatprep.subr.mxu0 %v223
    %283 = vmatpush1.msra.mxu0 %v222
    %284 = vmatprep.subr.mxu0 %v220
    %285 = vmatpush1.msra.mxu0 %v219
    %286 = vmatprep.subr.mxu0 %v217
    %287 = vmatpush1.msra.mxu0 %v216
    %288 = vmatprep.subr.mxu0 %v214
    %289 = vmatpush1.msra.mxu0 %v213
    %290 = vmatprep.subr.mxu0 %v211
    %291 = vmatpush1.msra.mxu0 %v210
    %292 = vmatprep.subr.mxu0 %v208
    %293 = vmatpush1.msra.mxu0 %v207
    %294 = vmatprep.subr.mxu0 %v205
    %295 = vmatpush1.msra.mxu0 %v204
    %296 = vmatprep.subr.mxu0 %v202
    %297 = vmatpush1.msra.mxu0 %v201
    %298 = vmatprep.subr.mxu0 0.0
    %299 = vmatpush2.msra.mxu0 0.0
    %300 = vmatprep.subr.mxu0 0.0
    %301 = vmatpush2.msra.mxu0 0.0
    %302 = vmatprep.subr.mxu0 0.0
    %303 = vmatpush2.msra.mxu0 0.0
    %304 = vmatprep.subr.mxu0 0.0
    %305 = vmatpush2.msra.mxu0 0.0
    %306 = vmatprep.subr.mxu0 0.0
    %307 = vmatpush2.msra.mxu0 0.0
    %308 = vmatprep.subr.mxu0 0.0
    %309 = vmatpush2.msra.mxu0 0.0
    %310 = vmatprep.subr.mxu0 0.0
    %311 = vmatpush2.msra.mxu0 0.0
    %312 = vmatprep.subr.mxu0 0.0
    %313 = vmatpush2.msra.mxu0 0.0
    %314 = vmatprep.subr.mxu0 0.0
    %315 = vmatpush2.msra.mxu0 0.0
    %316 = vmatprep.subr.mxu0 0.0
    %317 = vmatpush2.msra.mxu0 0.0
    %318 = vmatprep.subr.mxu0 0.0
    %319 = vmatpush2.msra.mxu0 0.0
    %320 = vmatprep.subr.mxu0 0.0
    %321 = vmatpush2.msra.mxu0 0.0
    %322 = vmatprep.subr.mxu0 0.0
    %323 = vmatpush2.msra.mxu0 0.0
    %324 = vmatprep.subr.mxu0 0.0
    %325 = vmatpush2.msra.mxu0 0.0
    %326 = vmatprep.subr.mxu0 0.0
    %327 = vmatpush2.msra.mxu0 0.0
    %328 = vmatprep.subr.mxu0 0.0
    %329 = vmatpush2.msra.mxu0 0.0
    %330 = vmatprep.mubr.f32.mxu0 0.0
    %331 = vmatmul.mubr.f32.gmra.mxu0 %v193
    %v332 = vpop.f32.mrf.mxu0
    %v333 = vadd.f32 %v254, %v332
    %v334 = vpop.f32.mrf.mxu0
    %v335 = vadd.f32 %v258, %v334
    %336 = vmatprep.mubr.f32.mxu0 0.0
    %337 = vmatmul.mubr.f32.gmra.mxu0 %v194
    %v338 = vpop.f32.mrf.mxu0
    %v339 = vadd.f32 %v254, %v338
    %v340 = vpop.f32.mrf.mxu0
    %v341 = vadd.f32 %v258, %v340
    %342 = vdwg.mxu0
    %343 = vmatprep.subr.mxu0 0.0
    %344 = vmatpush1.msra.mxu0 %v248
    %345 = vmatprep.subr.mxu0 0.0
    %346 = vmatpush1.msra.mxu0 %v245
    %347 = vmatprep.subr.mxu0 0.0
    %348 = vmatpush1.msra.mxu0 %v242
    %349 = vmatprep.subr.mxu0 0.0
    %350 = vmatpush1.msra.mxu0 %v239
    %351 = vmatprep.subr.mxu0 0.0
    %352 = vmatpush1.msra.mxu0 %v236
    %353 = vmatprep.subr.mxu0 0.0
    %354 = vmatpush1.msra.mxu0 %v233
    %355 = vmatprep.subr.mxu0 0.0
    %356 = vmatpush1.msra.mxu0 %v230
    %357 = vmatprep.subr.mxu0 0.0
    %358 = vmatpush1.msra.mxu0 %v227
    %359 = vmatprep.subr.mxu0 0.0
    %360 = vmatpush1.msra.mxu0 %v224
    %361 = vmatprep.subr.mxu0 0.0
    %362 = vmatpush1.msra.mxu0 %v221
    %363 = vmatprep.subr.mxu0 0.0
    %364 = vmatpush1.msra.mxu0 %v218
    %365 = vmatprep.subr.mxu0 0.0
    %366 = vmatpush1.msra.mxu0 %v215
    %367 = vmatprep.subr.mxu0 0.0
    %368 = vmatpush1.msra.mxu0 %v212
    %369 = vmatprep.subr.mxu0 0.0
    %370 = vmatpush1.msra.mxu0 %v209
    %371 = vmatprep.subr.mxu0 0.0
    %372 = vmatpush1.msra.mxu0 %v206
    %373 = vmatprep.subr.mxu0 0.0
    %374 = vmatpush1.msra.mxu0 %v203
    %375 = vmatprep.subr.mxu0 0.0
    %376 = vmatpush2.msra.mxu0 0.0
    %377 = vmatprep.subr.mxu0 0.0
    %378 = vmatpush2.msra.mxu0 0.0
    %379 = vmatprep.subr.mxu0 0.0
    %380 = vmatpush2.msra.mxu0 0.0
    %381 = vmatprep.subr.mxu0 0.0
    %382 = vmatpush2.msra.mxu0 0.0
    %383 = vmatprep.subr.mxu0 0.0
    %384 = vmatpush2.msra.mxu0 0.0
    %385 = vmatprep.subr.mxu0 0.0
    %386 = vmatpush2.msra.mxu0 0.0
    %387 = vmatprep.subr.mxu0 0.0
    %388 = vmatpush2.msra.mxu0 0.0
    %389 = vmatprep.subr.mxu0 0.0
    %390 = vmatpush2.msra.mxu0 0.0
    %391 = vmatprep.subr.mxu0 0.0
    %392 = vmatpush2.msra.mxu0 0.0
    %393 = vmatprep.subr.mxu0 0.0
    %394 = vmatpush2.msra.mxu0 0.0
    %395 = vmatprep.subr.mxu0 0.0
    %396 = vmatpush2.msra.mxu0 0.0
    %397 = vmatprep.subr.mxu0 0.0
    %398 = vmatpush2.msra.mxu0 0.0
    %399 = vmatprep.subr.mxu0 0.0
    %400 = vmatpush2.msra.mxu0 0.0
    %401 = vmatprep.subr.mxu0 0.0
    %402 = vmatpush2.msra.mxu0 0.0
    %403 = vmatprep.subr.mxu0 0.0
    %404 = vmatpush2.msra.mxu0 0.0
    %405 = vmatprep.subr.mxu0 0.0
    %406 = vmatpush2.msra.mxu0 0.0
    %407 = vmatprep.mubr.f32.mxu0 0.0
    %408 = vmatmul.mubr.f32.gmra.mxu0 %v193
    %v409 = vpop.f32.mrf.mxu0
    %v410 = vadd.f32 %v262, %v409
    %v411 = vpop.f32.mrf.mxu0
    %412 = vmatprep.mubr.f32.mxu0 0.0
    %413 = vmatmul.mubr.f32.gmra.mxu0 %v194
    %v414 = vpop.f32.mrf.mxu0
    %v415 = vadd.f32 %v262, %v414
    %v416 = vpop.f32.mrf.mxu0
    %417 = vdwg.mxu0
    %v418 = vld [vmem:[#allocation17 + $0x80] sm:$0xff]
    %v419 = vld [vmem:[#allocation17 + $0x88] sm:$0xff]
    %v420 = vld [vmem:[#allocation17 + $0x90] sm:$0xff]
    %v421 = vld [vmem:[#allocation17 + $0x98] sm:$0xff]
    %v422 = vld [vmem:[#allocation17 + $0xa0] sm:$0xff]
    %v423 = vld [vmem:[#allocation17 + $0xa8] sm:$0xff]
    %v424 = vld [vmem:[#allocation17 + $0xb0] sm:$0xff]
    %v425 = vld [vmem:[#allocation17 + $0xb8] sm:$0xff]
    %v426 = vld [vmem:[#allocation17 + $0xc0] sm:$0xff]
    %v427 = vld [vmem:[#allocation17 + $0xc8] sm:$0xff]
    %v428 = vld [vmem:[#allocation17 + $0xd0] sm:$0xff]
    %v429 = vld [vmem:[#allocation17 + $0xd8] sm:$0xff]
    %v430 = vld [vmem:[#allocation17 + $0xe0] sm:$0xff]
    %v431 = vld [vmem:[#allocation17 + $0xe8] sm:$0xff]
    %v432 = vld [vmem:[#allocation17 + $0xf0] sm:$0xff]
    %v433 = vld [vmem:[#allocation17 + $0xf8] sm:$0xff]
    %v434 = vld [vmem:[%s16] sm:$0x1]
    %v436 = vlaneseq
    %v437 = vshrl.u32 %v436, 7
    %v438 = vsub.s32 0, %v437
    %v439 = vrot.slane %v434, %v438
    %441 = vmatprep.subr.mxu0 0.0
    %442 = vmatpush1.msra.mxu0 %v433
    %443 = vmatprep.subr.mxu0 0.0
    %444 = vmatpush1.msra.mxu0 %v432
    %445 = vmatprep.subr.mxu0 0.0
    %446 = vmatpush1.msra.mxu0 %v431
    %447 = vmatprep.subr.mxu0 0.0
    %448 = vmatpush1.msra.mxu0 %v430
    %449 = vmatprep.subr.mxu0 0.0
    %450 = vmatpush1.msra.mxu0 %v429
    %451 = vmatprep.subr.mxu0 0.0
    %452 = vmatpush1.msra.mxu0 %v428
    %453 = vmatprep.subr.mxu0 0.0
    %454 = vmatpush1.msra.mxu0 %v427
    %455 = vmatprep.subr.mxu0 0.0
    %456 = vmatpush1.msra.mxu0 %v426
    %457 = vmatprep.subr.mxu0 0.0
    %458 = vmatpush1.msra.mxu0 %v425
    %459 = vmatprep.subr.mxu0 0.0
    %460 = vmatpush1.msra.mxu0 %v424
    %461 = vmatprep.subr.mxu0 0.0
    %462 = vmatpush1.msra.mxu0 %v423
    %463 = vmatprep.subr.mxu0 0.0
    %464 = vmatpush1.msra.mxu0 %v422
    %465 = vmatprep.subr.mxu0 0.0
    %466 = vmatpush1.msra.mxu0 %v421
    %467 = vmatprep.subr.mxu0 0.0
    %468 = vmatpush1.msra.mxu0 %v420
    %469 = vmatprep.subr.mxu0 0.0
    %470 = vmatpush1.msra.mxu0 %v419
    %471 = vmatprep.subr.mxu0 0.0
    %472 = vmatpush1.msra.mxu0 %v418
    %473 = vmatprep.subr.mxu0 0.0
    %474 = vmatpush2.msra.mxu0 0.0
    %475 = vmatprep.subr.mxu0 0.0
    %476 = vmatpush2.msra.mxu0 0.0
    %477 = vmatprep.subr.mxu0 0.0
    %478 = vmatpush2.msra.mxu0 0.0
    %479 = vmatprep.subr.mxu0 0.0
    %480 = vmatpush2.msra.mxu0 0.0
    %481 = vmatprep.subr.mxu0 0.0
    %482 = vmatpush2.msra.mxu0 0.0
    %483 = vmatprep.subr.mxu0 0.0
    %484 = vmatpush2.msra.mxu0 0.0
    %485 = vmatprep.subr.mxu0 0.0
    %486 = vmatpush2.msra.mxu0 0.0
    %487 = vmatprep.subr.mxu0 0.0
    %488 = vmatpush2.msra.mxu0 0.0
    %489 = vmatprep.subr.mxu0 0.0
    %490 = vmatpush2.msra.mxu0 0.0
    %491 = vmatprep.subr.mxu0 0.0
    %492 = vmatpush2.msra.mxu0 0.0
    %493 = vmatprep.subr.mxu0 0.0
    %494 = vmatpush2.msra.mxu0 0.0
    %495 = vmatprep.subr.mxu0 0.0
    %496 = vmatpush2.msra.mxu0 0.0
    %497 = vmatprep.subr.mxu0 0.0
    %498 = vmatpush2.msra.mxu0 0.0
    %499 = vmatprep.subr.mxu0 0.0
    %500 = vmatpush2.msra.mxu0 0.0
    %501 = vmatprep.subr.mxu0 0.0
    %502 = vmatpush2.msra.mxu0 0.0
    %503 = vmatprep.subr.mxu0 0.0
    %504 = vmatpush2.msra.mxu0 0.0
    %505 = vmatprep.mubr.f32.mxu0 0.0
    %506 = vmatmul.mubr.f32.gmra.mxu0 %v193
    %v507 = vpop.f32.mrf.mxu0
    %v508 = vadd.f32 %v439, %v507
    %v509 = vpop.f32.mrf.mxu0
    %510 = vmatprep.mubr.f32.mxu0 0.0
    %511 = vmatmul.mubr.f32.gmra.mxu0 %v194
    %v512 = vpop.f32.mrf.mxu0
    %v513 = vadd.f32 %v439, %v512
    %v514 = vpop.f32.mrf.mxu0
    %515 = vdwg.mxu0
    %v516 = vld [vmem:[#allocation7] sm:$0xff]
    %v517 = vld [vmem:[#allocation7 + $0x8] sm:$0xff]
    %v518 = vld [vmem:[#allocation8] sm:$0xff]
    %v519 = vld [vmem:[#allocation8 + $0x8] sm:$0xff]
    %v520 = vld [vmem:[#allocation8 + $0x10] sm:$0xff]
    %v521 = vld [vmem:[#allocation8 + $0x18] sm:$0xff]
    %v522 = vld [vmem:[#allocation8 + $0x20] sm:$0xff]
    %v523 = vld [vmem:[#allocation8 + $0x28] sm:$0xff]
    %v524 = vld [vmem:[#allocation8 + $0x30] sm:$0xff]
    %v525 = vld [vmem:[#allocation8 + $0x38] sm:$0xff]
    %v526 = vld [vmem:[#allocation8 + $0x40] sm:$0xff]
    %v527 = vld [vmem:[#allocation8 + $0x48] sm:$0xff]
    %v528 = vld [vmem:[#allocation8 + $0x50] sm:$0xff]
    %v529 = vld [vmem:[#allocation8 + $0x58] sm:$0xff]
    %v530 = vld [vmem:[#allocation8 + $0x60] sm:$0xff]
    %v531 = vld [vmem:[#allocation8 + $0x68] sm:$0xff]
    %v532 = vld [vmem:[#allocation8 + $0x70] sm:$0xff]
    %v533 = vld [vmem:[#allocation8 + $0x78] sm:$0xff]
    %v535 = vlaneseq
    %v536 = vshrl.u32 %v535, 7
    %v537 = vsub.s32 0, %v536
    %v538 = vrot.slane %v195, %v537
    %540 = vmatprep.subr.mxu0 0.0
    %541 = vmatpush1.msra.mxu0 %v533
    %542 = vmatprep.subr.mxu0 0.0
    %543 = vmatpush1.msra.mxu0 %v532
    %544 = vmatprep.subr.mxu0 0.0
    %545 = vmatpush1.msra.mxu0 %v531
    %546 = vmatprep.subr.mxu0 0.0
    %547 = vmatpush1.msra.mxu0 %v530
    %548 = vmatprep.subr.mxu0 0.0
    %549 = vmatpush1.msra.mxu0 %v529
    %550 = vmatprep.subr.mxu0 0.0
    %551 = vmatpush1.msra.mxu0 %v528
    %552 = vmatprep.subr.mxu0 0.0
    %553 = vmatpush1.msra.mxu0 %v527
    %554 = vmatprep.subr.mxu0 0.0
    %555 = vmatpush1.msra.mxu0 %v526
    %556 = vmatprep.subr.mxu0 0.0
    %557 = vmatpush1.msra.mxu0 %v525
    %558 = vmatprep.subr.mxu0 0.0
    %559 = vmatpush1.msra.mxu0 %v524
    %560 = vmatprep.subr.mxu0 0.0
    %561 = vmatpush1.msra.mxu0 %v523
    %562 = vmatprep.subr.mxu0 0.0
    %563 = vmatpush1.msra.mxu0 %v522
    %564 = vmatprep.subr.mxu0 0.0
    %565 = vmatpush1.msra.mxu0 %v521
    %566 = vmatprep.subr.mxu0 0.0
    %567 = vmatpush1.msra.mxu0 %v520
    %568 = vmatprep.subr.mxu0 0.0
    %569 = vmatpush1.msra.mxu0 %v519
    %570 = vmatprep.subr.mxu0 0.0
    %571 = vmatpush1.msra.mxu0 %v518
    %572 = vmatprep.subr.mxu0 0.0
    %573 = vmatpush2.msra.mxu0 0.0
    %574 = vmatprep.subr.mxu0 0.0
    %575 = vmatpush2.msra.mxu0 0.0
    %576 = vmatprep.subr.mxu0 0.0
    %577 = vmatpush2.msra.mxu0 0.0
    %578 = vmatprep.subr.mxu0 0.0
    %579 = vmatpush2.msra.mxu0 0.0
    %580 = vmatprep.subr.mxu0 0.0
    %581 = vmatpush2.msra.mxu0 0.0
    %582 = vmatprep.subr.mxu0 0.0
    %583 = vmatpush2.msra.mxu0 0.0
    %584 = vmatprep.subr.mxu0 0.0
    %585 = vmatpush2.msra.mxu0 0.0
    %586 = vmatprep.subr.mxu0 0.0
    %587 = vmatpush2.msra.mxu0 0.0
    %588 = vmatprep.subr.mxu0 0.0
    %589 = vmatpush2.msra.mxu0 0.0
    %590 = vmatprep.subr.mxu0 0.0
    %591 = vmatpush2.msra.mxu0 0.0
    %592 = vmatprep.subr.mxu0 0.0
    %593 = vmatpush2.msra.mxu0 0.0
    %594 = vmatprep.subr.mxu0 0.0
    %595 = vmatpush2.msra.mxu0 0.0
    %596 = vmatprep.subr.mxu0 0.0
    %597 = vmatpush2.msra.mxu0 0.0
    %598 = vmatprep.subr.mxu0 0.0
    %599 = vmatpush2.msra.mxu0 0.0
    %600 = vmatprep.subr.mxu0 0.0
    %601 = vmatpush2.msra.mxu0 0.0
    %602 = vmatprep.subr.mxu0 0.0
    %603 = vmatpush2.msra.mxu0 0.0
    %604 = vmatprep.mubr.f32.mxu0 0.0
    %605 = vmatmul.mubr.f32.gmra.mxu0 %v516
    %v606 = vpop.f32.mrf.mxu0
    %v607 = vadd.f32 %v538, %v606
    %v608 = vpop.f32.mrf.mxu0
    %609 = vmatprep.mubr.f32.mxu0 0.0
    %610 = vmatmul.mubr.f32.gmra.mxu0 %v517
    %v611 = vpop.f32.mrf.mxu0
    %v612 = vadd.f32 %v538, %v611
    %v613 = vpop.f32.mrf.mxu0
    %614 = vdwg.mxu0
    %v615 = vld [vmem:[#allocation11] sm:$0xff]
    %v616 = vld [vmem:[#allocation11 + $0x8] sm:$0xff]
    %v617 = vld [vmem:[#allocation11 + $0x10] sm:$0xff]
    %v618 = vld [vmem:[#allocation11 + $0x18] sm:$0xff]
    %v619 = vld [vmem:[#allocation11 + $0x20] sm:$0xff]
    %v620 = vld [vmem:[#allocation11 + $0x28] sm:$0xff]
    %v621 = vld [vmem:[#allocation11 + $0x30] sm:$0xff]
    %v622 = vld [vmem:[#allocation11 + $0x38] sm:$0xff]
    %v623 = vld [vmem:[#allocation11 + $0x40] sm:$0xff]
    %v624 = vld [vmem:[#allocation11 + $0x48] sm:$0xff]
    %v625 = vld [vmem:[#allocation11 + $0x50] sm:$0xff]
    %v626 = vld [vmem:[#allocation11 + $0x58] sm:$0xff]
    %v627 = vld [vmem:[#allocation11 + $0x60] sm:$0xff]
    %v628 = vld [vmem:[#allocation11 + $0x68] sm:$0xff]
    %v629 = vld [vmem:[#allocation11 + $0x70] sm:$0xff]
    %v630 = vld [vmem:[#allocation11 + $0x78] sm:$0xff]
    %v632 = vlaneseq
    %v633 = vshrl.u32 %v632, 7
    %v634 = vsub.s32 0, %v633
    %v635 = vrot.slane %v196, %v634
    %637 = vmatprep.subr.mxu0 0.0
    %638 = vmatpush1.msra.mxu0 %v630
    %639 = vmatprep.subr.mxu0 0.0
    %640 = vmatpush1.msra.mxu0 %v629
    %641 = vmatprep.subr.mxu0 0.0
    %642 = vmatpush1.msra.mxu0 %v628
    %643 = vmatprep.subr.mxu0 0.0
    %644 = vmatpush1.msra.mxu0 %v627
    %645 = vmatprep.subr.mxu0 0.0
    %646 = vmatpush1.msra.mxu0 %v626
    %647 = vmatprep.subr.mxu0 0.0
    %648 = vmatpush1.msra.mxu0 %v625
    %649 = vmatprep.subr.mxu0 0.0
    %650 = vmatpush1.msra.mxu0 %v624
    %651 = vmatprep.subr.mxu0 0.0
    %652 = vmatpush1.msra.mxu0 %v623
    %653 = vmatprep.subr.mxu0 0.0
    %654 = vmatpush1.msra.mxu0 %v622
    %655 = vmatprep.subr.mxu0 0.0
    %656 = vmatpush1.msra.mxu0 %v621
    %657 = vmatprep.subr.mxu0 0.0
    %658 = vmatpush1.msra.mxu0 %v620
    %659 = vmatprep.subr.mxu0 0.0
    %660 = vmatpush1.msra.mxu0 %v619
    %661 = vmatprep.subr.mxu0 0.0
    %662 = vmatpush1.msra.mxu0 %v618
    %663 = vmatprep.subr.mxu0 0.0
    %664 = vmatpush1.msra.mxu0 %v617
    %665 = vmatprep.subr.mxu0 0.0
    %666 = vmatpush1.msra.mxu0 %v616
    %667 = vmatprep.subr.mxu0 0.0
    %668 = vmatpush1.msra.mxu0 %v615
    %669 = vmatprep.subr.mxu0 0.0
    %670 = vmatpush2.msra.mxu0 0.0
    %671 = vmatprep.subr.mxu0 0.0
    %672 = vmatpush2.msra.mxu0 0.0
    %673 = vmatprep.subr.mxu0 0.0
    %674 = vmatpush2.msra.mxu0 0.0
    %675 = vmatprep.subr.mxu0 0.0
    %676 = vmatpush2.msra.mxu0 0.0
    %677 = vmatprep.subr.mxu0 0.0
    %678 = vmatpush2.msra.mxu0 0.0
    %679 = vmatprep.subr.mxu0 0.0
    %680 = vmatpush2.msra.mxu0 0.0
    %681 = vmatprep.subr.mxu0 0.0
    %682 = vmatpush2.msra.mxu0 0.0
    %683 = vmatprep.subr.mxu0 0.0
    %684 = vmatpush2.msra.mxu0 0.0
    %685 = vmatprep.subr.mxu0 0.0
    %686 = vmatpush2.msra.mxu0 0.0
    %687 = vmatprep.subr.mxu0 0.0
    %688 = vmatpush2.msra.mxu0 0.0
    %689 = vmatprep.subr.mxu0 0.0
    %690 = vmatpush2.msra.mxu0 0.0
    %691 = vmatprep.subr.mxu0 0.0
    %692 = vmatpush2.msra.mxu0 0.0
    %693 = vmatprep.subr.mxu0 0.0
    %694 = vmatpush2.msra.mxu0 0.0
    %695 = vmatprep.subr.mxu0 0.0
    %696 = vmatpush2.msra.mxu0 0.0
    %697 = vmatprep.subr.mxu0 0.0
    %698 = vmatpush2.msra.mxu0 0.0
    %699 = vmatprep.subr.mxu0 0.0
    %700 = vmatpush2.msra.mxu0 0.0
    %701 = vmatprep.mubr.f32.mxu0 0.0
    %702 = vmatmul.mubr.f32.gmra.mxu0 %v516
    %v703 = vpop.f32.mrf.mxu0
    %v704 = vadd.f32 %v635, %v703
    %v705 = vpop.f32.mrf.mxu0
    %706 = vmatprep.mubr.f32.mxu0 0.0
    %707 = vmatmul.mubr.f32.gmra.mxu0 %v517
    %v708 = vpop.f32.mrf.mxu0
    %v709 = vadd.f32 %v635, %v708
    %v710 = vpop.f32.mrf.mxu0
    %711 = vdwg.mxu0
    %vm712 = vcmask 64512
    %v714 = vsel %vm712, %v191, 0
    %716 = vmatprep.subr.mxu0 0.0
    %717 = vmatpush1.msra.mxu0 0.0
    %718 = vmatprep.subr.mxu0 0.0
    %719 = vmatpush1.msra.mxu0 0.0
    %720 = vmatprep.subr.mxu0 0.0
    %721 = vmatpush1.msra.mxu0 0.0
    %722 = vmatprep.subr.mxu0 0.0
    %723 = vmatpush1.msra.mxu0 0.0
    %724 = vmatprep.subr.mxu0 0.0
    %725 = vmatpush1.msra.mxu0 0.0
    %726 = vmatprep.subr.mxu0 0.0
    %727 = vmatpush1.msra.mxu0 0.0
    %728 = vmatprep.subr.mxu0 0.0
    %729 = vmatpush1.msra.mxu0 0.0
    %730 = vmatprep.subr.mxu0 0.0
    %731 = vmatpush1.msra.mxu0 0.0
    %732 = vmatprep.subr.mxu0 0.0
    %733 = vmatpush1.msra.mxu0 0.0
    %734 = vmatprep.subr.mxu0 0.0
    %735 = vmatpush1.msra.mxu0 0.0
    %736 = vmatprep.subr.mxu0 0.0
    %737 = vmatpush1.msra.mxu0 0.0
    %738 = vmatprep.subr.mxu0 0.0
    %739 = vmatpush1.msra.mxu0 0.0
    %740 = vmatprep.subr.mxu0 0.0
    %741 = vmatpush1.msra.mxu0 0.0
    %742 = vmatprep.subr.mxu0 0.0
    %743 = vmatpush1.msra.mxu0 0.0
    %744 = vmatprep.subr.mxu0 0.0
    %745 = vmatpush1.msra.mxu0 0.0
    %746 = vmatprep.subr.mxu0 0.0
    %747 = vmatpush1.msra.mxu0 %v607
    %748 = vmatprep.subr.mxu0 0.0
    %749 = vmatpush2.msra.mxu0 0.0
    %750 = vmatprep.subr.mxu0 0.0
    %751 = vmatpush2.msra.mxu0 0.0
    %752 = vmatprep.subr.mxu0 0.0
    %753 = vmatpush2.msra.mxu0 0.0
    %754 = vmatprep.subr.mxu0 0.0
    %755 = vmatpush2.msra.mxu0 0.0
    %756 = vmatprep.subr.mxu0 0.0
    %757 = vmatpush2.msra.mxu0 0.0
    %758 = vmatprep.subr.mxu0 0.0
    %759 = vmatpush2.msra.mxu0 0.0
    %760 = vmatprep.subr.mxu0 0.0
    %761 = vmatpush2.msra.mxu0 0.0
    %762 = vmatprep.subr.mxu0 0.0
    %763 = vmatpush2.msra.mxu0 0.0
    %764 = vmatprep.subr.mxu0 0.0
    %765 = vmatpush2.msra.mxu0 0.0
    %766 = vmatprep.subr.mxu0 0.0
    %767 = vmatpush2.msra.mxu0 0.0
    %768 = vmatprep.subr.mxu0 0.0
    %769 = vmatpush2.msra.mxu0 0.0
    %770 = vmatprep.subr.mxu0 0.0
    %771 = vmatpush2.msra.mxu0 0.0
    %772 = vmatprep.subr.mxu0 0.0
    %773 = vmatpush2.msra.mxu0 0.0
    %774 = vmatprep.subr.mxu0 0.0
    %775 = vmatpush2.msra.mxu0 0.0
    %776 = vmatprep.subr.mxu0 0.0
    %777 = vmatpush2.msra.mxu0 0.0
    %778 = vmatprep.subr.mxu0 0.0
    %779 = vmatpush2.msra.mxu0 0.0
    %780 = vmatprep.mubr.f32.mxu0 0.0
    %781 = vmatmul.mubr.f32.gmra.mxu0 %v714
    %v782 = vpop.f32.mrf.mxu0
    %v783 = vadd.f32 0.0, %v782
    %v784 = vpop.f32.mrf.mxu0
    %785 = vdwg.mxu0
    %v787 = vsel %vm712, %v192, 0
    %789 = vmatprep.subr.mxu0 0.0
    %790 = vmatpush1.msra.mxu0 0.0
    %791 = vmatprep.subr.mxu0 0.0
    %792 = vmatpush1.msra.mxu0 0.0
    %793 = vmatprep.subr.mxu0 0.0
    %794 = vmatpush1.msra.mxu0 0.0
    %795 = vmatprep.subr.mxu0 0.0
    %796 = vmatpush1.msra.mxu0 0.0
    %797 = vmatprep.subr.mxu0 0.0
    %798 = vmatpush1.msra.mxu0 0.0
    %799 = vmatprep.subr.mxu0 0.0
    %800 = vmatpush1.msra.mxu0 0.0
    %801 = vmatprep.subr.mxu0 0.0
    %802 = vmatpush1.msra.mxu0 0.0
    %803 = vmatprep.subr.mxu0 0.0
    %804 = vmatpush1.msra.mxu0 0.0
    %805 = vmatprep.subr.mxu0 0.0
    %806 = vmatpush1.msra.mxu0 0.0
    %807 = vmatprep.subr.mxu0 0.0
    %808 = vmatpush1.msra.mxu0 0.0
    %809 = vmatprep.subr.mxu0 0.0
    %810 = vmatpush1.msra.mxu0 0.0
    %811 = vmatprep.subr.mxu0 0.0
    %812 = vmatpush1.msra.mxu0 0.0
    %813 = vmatprep.subr.mxu0 0.0
    %814 = vmatpush1.msra.mxu0 0.0
    %815 = vmatprep.subr.mxu0 0.0
    %816 = vmatpush1.msra.mxu0 0.0
    %817 = vmatprep.subr.mxu0 0.0
    %818 = vmatpush1.msra.mxu0 0.0
    %819 = vmatprep.subr.mxu0 0.0
    %820 = vmatpush1.msra.mxu0 %v612
    %821 = vmatprep.subr.mxu0 0.0
    %822 = vmatpush2.msra.mxu0 0.0
    %823 = vmatprep.subr.mxu0 0.0
    %824 = vmatpush2.msra.mxu0 0.0
    %825 = vmatprep.subr.mxu0 0.0
    %826 = vmatpush2.msra.mxu0 0.0
    %827 = vmatprep.subr.mxu0 0.0
    %828 = vmatpush2.msra.mxu0 0.0
    %829 = vmatprep.subr.mxu0 0.0
    %830 = vmatpush2.msra.mxu0 0.0
    %831 = vmatprep.subr.mxu0 0.0
    %832 = vmatpush2.msra.mxu0 0.0
    %833 = vmatprep.subr.mxu0 0.0
    %834 = vmatpush2.msra.mxu0 0.0
    %835 = vmatprep.subr.mxu0 0.0
    %836 = vmatpush2.msra.mxu0 0.0
    %837 = vmatprep.subr.mxu0 0.0
    %838 = vmatpush2.msra.mxu0 0.0
    %839 = vmatprep.subr.mxu0 0.0
    %840 = vmatpush2.msra.mxu0 0.0
    %841 = vmatprep.subr.mxu0 0.0
    %842 = vmatpush2.msra.mxu0 0.0
    %843 = vmatprep.subr.mxu0 0.0
    %844 = vmatpush2.msra.mxu0 0.0
    %845 = vmatprep.subr.mxu0 0.0
    %846 = vmatpush2.msra.mxu0 0.0
    %847 = vmatprep.subr.mxu0 0.0
    %848 = vmatpush2.msra.mxu0 0.0
    %849 = vmatprep.subr.mxu0 0.0
    %850 = vmatpush2.msra.mxu0 0.0
    %851 = vmatprep.subr.mxu0 0.0
    %852 = vmatpush2.msra.mxu0 0.0
    %853 = vmatprep.mubr.f32.mxu0 0.0
    %854 = vmatmul.mubr.f32.gmra.mxu0 %v787
    %v855 = vpop.f32.mrf.mxu0
    %v856 = vadd.f32 0.0, %v855
    %v857 = vpop.f32.mrf.mxu0
    %858 = vdwg.mxu0
    %v860 = vlaneseq
    %v861 = vshrl.u32 %v860, 7
    %v862 = vsub.s32 0, %v861
    %v863 = vrot.slane %v197, %v862
    %v865 = vadd.f32 %v783, %v863
    %v866 = vadd.f32 %v856, %v863
    %867 = vrot.lane.b32.xlu0 %v191, 120
    %v868 = vpop.permute.xlu0 %867
    %v869 = vsel %vm712, %v868, 0
    %871 = vmatprep.subr.mxu0 0.0
    %872 = vmatpush1.msra.mxu0 0.0
    %873 = vmatprep.subr.mxu0 0.0
    %874 = vmatpush1.msra.mxu0 0.0
    %875 = vmatprep.subr.mxu0 0.0
    %876 = vmatpush1.msra.mxu0 0.0
    %877 = vmatprep.subr.mxu0 0.0
    %878 = vmatpush1.msra.mxu0 0.0
    %879 = vmatprep.subr.mxu0 0.0
    %880 = vmatpush1.msra.mxu0 0.0
    %881 = vmatprep.subr.mxu0 0.0
    %882 = vmatpush1.msra.mxu0 0.0
    %883 = vmatprep.subr.mxu0 0.0
    %884 = vmatpush1.msra.mxu0 0.0
    %885 = vmatprep.subr.mxu0 0.0
    %886 = vmatpush1.msra.mxu0 0.0
    %887 = vmatprep.subr.mxu0 0.0
    %888 = vmatpush1.msra.mxu0 0.0
    %889 = vmatprep.subr.mxu0 0.0
    %890 = vmatpush1.msra.mxu0 0.0
    %891 = vmatprep.subr.mxu0 0.0
    %892 = vmatpush1.msra.mxu0 0.0
    %893 = vmatprep.subr.mxu0 0.0
    %894 = vmatpush1.msra.mxu0 0.0
    %895 = vmatprep.subr.mxu0 0.0
    %896 = vmatpush1.msra.mxu0 0.0
    %897 = vmatprep.subr.mxu0 0.0
    %898 = vmatpush1.msra.mxu0 0.0
    %899 = vmatprep.subr.mxu0 0.0
    %900 = vmatpush1.msra.mxu0 0.0
    %901 = vmatprep.subr.mxu0 0.0
    %902 = vmatpush1.msra.mxu0 %v704
    %903 = vmatprep.subr.mxu0 0.0
    %904 = vmatpush2.msra.mxu0 0.0
    %905 = vmatprep.subr.mxu0 0.0
    %906 = vmatpush2.msra.mxu0 0.0
    %907 = vmatprep.subr.mxu0 0.0
    %908 = vmatpush2.msra.mxu0 0.0
    %909 = vmatprep.subr.mxu0 0.0
    %910 = vmatpush2.msra.mxu0 0.0
    %911 = vmatprep.subr.mxu0 0.0
    %912 = vmatpush2.msra.mxu0 0.0
    %913 = vmatprep.subr.mxu0 0.0
    %914 = vmatpush2.msra.mxu0 0.0
    %915 = vmatprep.subr.mxu0 0.0
    %916 = vmatpush2.msra.mxu0 0.0
    %917 = vmatprep.subr.mxu0 0.0
    %918 = vmatpush2.msra.mxu0 0.0
    %919 = vmatprep.subr.mxu0 0.0
    %920 = vmatpush2.msra.mxu0 0.0
    %921 = vmatprep.subr.mxu0 0.0
    %922 = vmatpush2.msra.mxu0 0.0
    %923 = vmatprep.subr.mxu0 0.0
    %924 = vmatpush2.msra.mxu0 0.0
    %925 = vmatprep.subr.mxu0 0.0
    %926 = vmatpush2.msra.mxu0 0.0
    %927 = vmatprep.subr.mxu0 0.0
    %928 = vmatpush2.msra.mxu0 0.0
    %929 = vmatprep.subr.mxu0 0.0
    %930 = vmatpush2.msra.mxu0 0.0
    %931 = vmatprep.subr.mxu0 0.0
    %932 = vmatpush2.msra.mxu0 0.0
    %933 = vmatprep.subr.mxu0 0.0
    %934 = vmatpush2.msra.mxu0 0.0
    %935 = vmatprep.mubr.f32.mxu0 0.0
    %936 = vmatmul.mubr.f32.gmra.mxu0 %v869
    %v937 = vpop.f32.mrf.mxu0
    %v938 = vadd.f32 0.0, %v937
    %v939 = vpop.f32.mrf.mxu0
    %940 = vdwg.mxu0
    %941 = vrot.lane.b32.xlu0 %v192, 120
    %v942 = vpop.permute.xlu0 %941
    %v943 = vsel %vm712, %v942, 0
    %945 = vmatprep.subr.mxu0 0.0
    %946 = vmatpush1.msra.mxu0 0.0
    %947 = vmatprep.subr.mxu0 0.0
    %948 = vmatpush1.msra.mxu0 0.0
    %949 = vmatprep.subr.mxu0 0.0
    %950 = vmatpush1.msra.mxu0 0.0
    %951 = vmatprep.subr.mxu0 0.0
    %952 = vmatpush1.msra.mxu0 0.0
    %953 = vmatprep.subr.mxu0 0.0
    %954 = vmatpush1.msra.mxu0 0.0
    %955 = vmatprep.subr.mxu0 0.0
    %956 = vmatpush1.msra.mxu0 0.0
    %957 = vmatprep.subr.mxu0 0.0
    %958 = vmatpush1.msra.mxu0 0.0
    %959 = vmatprep.subr.mxu0 0.0
    %960 = vmatpush1.msra.mxu0 0.0
    %961 = vmatprep.subr.mxu0 0.0
    %962 = vmatpush1.msra.mxu0 0.0
    %963 = vmatprep.subr.mxu0 0.0
    %964 = vmatpush1.msra.mxu0 0.0
    %965 = vmatprep.subr.mxu0 0.0
    %966 = vmatpush1.msra.mxu0 0.0
    %967 = vmatprep.subr.mxu0 0.0
    %968 = vmatpush1.msra.mxu0 0.0
    %969 = vmatprep.subr.mxu0 0.0
    %970 = vmatpush1.msra.mxu0 0.0
    %971 = vmatprep.subr.mxu0 0.0
    %972 = vmatpush1.msra.mxu0 0.0
    %973 = vmatprep.subr.mxu0 0.0
    %974 = vmatpush1.msra.mxu0 0.0
    %975 = vmatprep.subr.mxu0 0.0
    %976 = vmatpush1.msra.mxu0 %v709
    %977 = vmatprep.subr.mxu0 0.0
    %978 = vmatpush2.msra.mxu0 0.0
    %979 = vmatprep.subr.mxu0 0.0
    %980 = vmatpush2.msra.mxu0 0.0
    %981 = vmatprep.subr.mxu0 0.0
    %982 = vmatpush2.msra.mxu0 0.0
    %983 = vmatprep.subr.mxu0 0.0
    %984 = vmatpush2.msra.mxu0 0.0
    %985 = vmatprep.subr.mxu0 0.0
    %986 = vmatpush2.msra.mxu0 0.0
    %987 = vmatprep.subr.mxu0 0.0
    %988 = vmatpush2.msra.mxu0 0.0
    %989 = vmatprep.subr.mxu0 0.0
    %990 = vmatpush2.msra.mxu0 0.0
    %991 = vmatprep.subr.mxu0 0.0
    %992 = vmatpush2.msra.mxu0 0.0
    %993 = vmatprep.subr.mxu0 0.0
    %994 = vmatpush2.msra.mxu0 0.0
    %995 = vmatprep.subr.mxu0 0.0
    %996 = vmatpush2.msra.mxu0 0.0
    %997 = vmatprep.subr.mxu0 0.0
    %998 = vmatpush2.msra.mxu0 0.0
    %999 = vmatprep.subr.mxu0 0.0
    %1000 = vmatpush2.msra.mxu0 0.0
    %1001 = vmatprep.subr.mxu0 0.0
    %1002 = vmatpush2.msra.mxu0 0.0
    %1003 = vmatprep.subr.mxu0 0.0
    %1004 = vmatpush2.msra.mxu0 0.0
    %1005 = vmatprep.subr.mxu0 0.0
    %1006 = vmatpush2.msra.mxu0 0.0
    %1007 = vmatprep.subr.mxu0 0.0
    %1008 = vmatpush2.msra.mxu0 0.0
    %1009 = vmatprep.mubr.f32.mxu0 0.0
    %1010 = vmatmul.mubr.f32.gmra.mxu0 %v943
    %v1011 = vpop.f32.mrf.mxu0
    %v1012 = vadd.f32 0.0, %v1011
    %v1013 = vpop.f32.mrf.mxu0
    %1014 = vdwg.mxu0
    %v1016 = vlaneseq
    %v1017 = vshrl.u32 %v1016, 7
    %v1018 = vsub.s32 0, %v1017
    %v1019 = vrot.slane %v198, %v1018
    %v1021 = vadd.f32 %v938, %v1019
    %v1022 = vadd.f32 %v1012, %v1019
    %v1023 = vld [vmem:[#allocation13] sm:$0xff]
    %v1024 = vld [vmem:[#allocation13 + $0x8] sm:$0xff]
    %v1025 = vld [vmem:[#allocation13 + $0x10] sm:$0xff]
    %v1026 = vld [vmem:[#allocation13 + $0x18] sm:$0xff]
    %v1027 = vld [vmem:[#allocation13 + $0x20] sm:$0xff]
    %v1028 = vld [vmem:[#allocation13 + $0x28] sm:$0xff]
    %v1029 = vld [vmem:[#allocation13 + $0x30] sm:$0xff]
    %v1030 = vld [vmem:[#allocation13 + $0x38] sm:$0xff]
    %v1031 = vld [vmem:[#allocation13 + $0x40] sm:$0xff]
    %v1032 = vld [vmem:[#allocation13 + $0x48] sm:$0xff]
    %v1033 = vld [vmem:[#allocation13 + $0x50] sm:$0xff]
    %v1034 = vld [vmem:[#allocation13 + $0x58] sm:$0xff]
    %v1035 = vld [vmem:[#allocation13 + $0x60] sm:$0xff]
    %v1036 = vld [vmem:[#allocation13 + $0x68] sm:$0xff]
    %v1037 = vld [vmem:[#allocation13 + $0x70] sm:$0xff]
    %v1038 = vld [vmem:[#allocation13 + $0x78] sm:$0xff]
    %v1039 = vld [vmem:[#allocation13 + $0x80] sm:$0xff]
    %v1040 = vld [vmem:[#allocation13 + $0x88] sm:$0xff]
    %v1041 = vld [vmem:[#allocation13 + $0x90] sm:$0xff]
    %v1042 = vld [vmem:[#allocation13 + $0x98] sm:$0xff]
    %v1043 = vld [vmem:[#allocation13 + $0xa0] sm:$0xff]
    %v1044 = vld [vmem:[#allocation13 + $0xa8] sm:$0xff]
    %v1045 = vld [vmem:[#allocation13 + $0xb0] sm:$0xff]
    %v1046 = vld [vmem:[#allocation13 + $0xb8] sm:$0xff]
    %v1047 = vld [vmem:[#allocation13 + $0xc0] sm:$0xff]
    %v1048 = vld [vmem:[#allocation13 + $0xc8] sm:$0xff]
    %v1049 = vld [vmem:[#allocation13 + $0xd0] sm:$0xff]
    %v1050 = vld [vmem:[#allocation13 + $0xd8] sm:$0xff]
    %v1051 = vld [vmem:[#allocation13 + $0xe0] sm:$0xff]
    %v1052 = vld [vmem:[#allocation13 + $0xe8] sm:$0xff]
    %v1053 = vld [vmem:[#allocation13 + $0xf0] sm:$0xff]
    %v1054 = vld [vmem:[#allocation13 + $0xf8] sm:$0xff]
    %v1055 = vld [vmem:[#allocation13 + $0x100] sm:$0xff]
    %v1056 = vld [vmem:[#allocation13 + $0x108] sm:$0xff]
    %v1057 = vld [vmem:[#allocation13 + $0x110] sm:$0xff]
    %v1058 = vld [vmem:[#allocation13 + $0x118] sm:$0xff]
    %v1059 = vld [vmem:[#allocation13 + $0x120] sm:$0xff]
    %v1060 = vld [vmem:[#allocation13 + $0x128] sm:$0xff]
    %v1061 = vld [vmem:[#allocation13 + $0x130] sm:$0xff]
    %v1062 = vld [vmem:[#allocation13 + $0x138] sm:$0xff]
    %v1063 = vld [vmem:[#allocation13 + $0x140] sm:$0xff]
    %v1064 = vld [vmem:[#allocation13 + $0x148] sm:$0xff]
    %v1065 = vld [vmem:[#allocation13 + $0x150] sm:$0xff]
    %v1066 = vld [vmem:[#allocation13 + $0x158] sm:$0xff]
    %v1067 = vld [vmem:[#allocation13 + $0x160] sm:$0xff]
    %v1068 = vld [vmem:[#allocation13 + $0x168] sm:$0xff]
    %v1069 = vld [vmem:[#allocation13 + $0x170] sm:$0xff]
    %v1070 = vld [vmem:[#allocation13 + $0x178] sm:$0xff]
    %v1071 = vld [vmem:[#allocation13 + $0x180] sm:$0xff]
    %v1072 = vld [vmem:[#allocation13 + $0x188] sm:$0xff]
    %v1073 = vld [vmem:[#allocation13 + $0x190] sm:$0xff]
    %v1074 = vld [vmem:[#allocation13 + $0x198] sm:$0xff]
    %v1075 = vld [vmem:[#allocation13 + $0x1a0] sm:$0xff]
    %v1076 = vld [vmem:[#allocation13 + $0x1a8] sm:$0xff]
    %v1077 = vld [vmem:[#allocation13 + $0x1b0] sm:$0xff]
    %v1078 = vld [vmem:[#allocation13 + $0x1b8] sm:$0xff]
    %v1079 = vld [vmem:[#allocation13 + $0x1c0] sm:$0xff]
    %v1080 = vld [vmem:[#allocation13 + $0x1c8] sm:$0xff]
    %v1081 = vld [vmem:[#allocation13 + $0x1d0] sm:$0xff]
    %v1082 = vld [vmem:[#allocation13 + $0x1d8] sm:$0xff]
    %v1083 = vld [vmem:[#allocation13 + $0x1e0] sm:$0xff]
    %v1084 = vld [vmem:[#allocation13 + $0x1e8] sm:$0xff]
    %v1085 = vld [vmem:[#allocation13 + $0x1f0] sm:$0xff]
    %v1086 = vld [vmem:[#allocation13 + $0x1f8] sm:$0xff]
    %v1087 = vld [vmem:[#allocation13 + $0x200] sm:$0xff]
    %v1088 = vld [vmem:[#allocation13 + $0x208] sm:$0xff]
    %v1089 = vld [vmem:[#allocation13 + $0x210] sm:$0xff]
    %v1090 = vld [vmem:[#allocation13 + $0x218] sm:$0xff]
    %v1091 = vld [vmem:[#allocation13 + $0x220] sm:$0xff]
    %v1092 = vld [vmem:[#allocation13 + $0x228] sm:$0xff]
    %v1093 = vld [vmem:[#allocation13 + $0x230] sm:$0xff]
    %v1094 = vld [vmem:[#allocation13 + $0x238] sm:$0xff]
    %v1095 = vld [vmem:[#allocation13 + $0x240] sm:$0xff]
    %v1096 = vld [vmem:[#allocation13 + $0x248] sm:$0xff]
    %v1097 = vld [vmem:[#allocation13 + $0x250] sm:$0xff]
    %v1098 = vld [vmem:[#allocation13 + $0x258] sm:$0xff]
    %v1099 = vld [vmem:[#allocation13 + $0x260] sm:$0xff]
    %v1100 = vld [vmem:[#allocation13 + $0x268] sm:$0xff]
    %v1101 = vld [vmem:[#allocation13 + $0x270] sm:$0xff]
    %v1102 = vld [vmem:[#allocation13 + $0x278] sm:$0xff]
    %v1103 = vld [vmem:[#allocation13 + $0x280] sm:$0xff]
    %v1104 = vld [vmem:[#allocation13 + $0x288] sm:$0xff]
    %v1105 = vld [vmem:[#allocation13 + $0x290] sm:$0xff]
    %v1106 = vld [vmem:[#allocation13 + $0x298] sm:$0xff]
    %v1107 = vld [vmem:[#allocation13 + $0x2a0] sm:$0xff]
    %v1108 = vld [vmem:[#allocation13 + $0x2a8] sm:$0xff]
    %v1109 = vld [vmem:[#allocation13 + $0x2b0] sm:$0xff]
    %v1110 = vld [vmem:[#allocation13 + $0x2b8] sm:$0xff]
    %v1111 = vld [vmem:[#allocation13 + $0x2c0] sm:$0xff]
    %v1112 = vld [vmem:[#allocation13 + $0x2c8] sm:$0xff]
    %v1113 = vld [vmem:[#allocation13 + $0x2d0] sm:$0xff]
    %v1114 = vld [vmem:[#allocation13 + $0x2d8] sm:$0xff]
    %v1115 = vld [vmem:[#allocation13 + $0x2e0] sm:$0xff]
    %v1116 = vld [vmem:[#allocation13 + $0x2e8] sm:$0xff]
    %v1117 = vld [vmem:[#allocation13 + $0x2f0] sm:$0xff]
    %v1118 = vld [vmem:[#allocation13 + $0x2f8] sm:$0xff]
    %1119 = vmatprep.subr.mxu0 %v1117
    %1120 = vmatpush1.msra.mxu0 %v1116
    %1121 = vmatprep.subr.mxu0 %v1114
    %1122 = vmatpush1.msra.mxu0 %v1113
    %1123 = vmatprep.subr.mxu0 %v1111
    %1124 = vmatpush1.msra.mxu0 %v1110
    %1125 = vmatprep.subr.mxu0 %v1108
    %1126 = vmatpush1.msra.mxu0 %v1107
    %1127 = vmatprep.subr.mxu0 %v1105
    %1128 = vmatpush1.msra.mxu0 %v1104
    %1129 = vmatprep.subr.mxu0 %v1102
    %1130 = vmatpush1.msra.mxu0 %v1101
    %1131 = vmatprep.subr.mxu0 %v1099
    %1132 = vmatpush1.msra.mxu0 %v1098
    %1133 = vmatprep.subr.mxu0 %v1096
    %1134 = vmatpush1.msra.mxu0 %v1095
    %1135 = vmatprep.subr.mxu0 %v1093
    %1136 = vmatpush1.msra.mxu0 %v1092
    %1137 = vmatprep.subr.mxu0 %v1090
    %1138 = vmatpush1.msra.mxu0 %v1089
    %1139 = vmatprep.subr.mxu0 %v1087
    %1140 = vmatpush1.msra.mxu0 %v1086
    %1141 = vmatprep.subr.mxu0 %v1084
    %1142 = vmatpush1.msra.mxu0 %v1083
    %1143 = vmatprep.subr.mxu0 %v1081
    %1144 = vmatpush1.msra.mxu0 %v1080
    %1145 = vmatprep.subr.mxu0 %v1078
    %1146 = vmatpush1.msra.mxu0 %v1077
    %1147 = vmatprep.subr.mxu0 %v1075
    %1148 = vmatpush1.msra.mxu0 %v1074
    %1149 = vmatprep.subr.mxu0 %v1072
    %1150 = vmatpush1.msra.mxu0 %v1071
    %1151 = vmatprep.subr.mxu0 0.0
    %1152 = vmatpush2.msra.mxu0 0.0
    %1153 = vmatprep.subr.mxu0 0.0
    %1154 = vmatpush2.msra.mxu0 0.0
    %1155 = vmatprep.subr.mxu0 0.0
    %1156 = vmatpush2.msra.mxu0 0.0
    %1157 = vmatprep.subr.mxu0 0.0
    %1158 = vmatpush2.msra.mxu0 0.0
    %1159 = vmatprep.subr.mxu0 0.0
    %1160 = vmatpush2.msra.mxu0 0.0
    %1161 = vmatprep.subr.mxu0 0.0
    %1162 = vmatpush2.msra.mxu0 0.0
    %1163 = vmatprep.subr.mxu0 0.0
    %1164 = vmatpush2.msra.mxu0 0.0
    %1165 = vmatprep.subr.mxu0 0.0
    %1166 = vmatpush2.msra.mxu0 0.0
    %1167 = vmatprep.subr.mxu0 0.0
    %1168 = vmatpush2.msra.mxu0 0.0
    %1169 = vmatprep.subr.mxu0 0.0
    %1170 = vmatpush2.msra.mxu0 0.0
    %1171 = vmatprep.subr.mxu0 0.0
    %1172 = vmatpush2.msra.mxu0 0.0
    %1173 = vmatprep.subr.mxu0 0.0
    %1174 = vmatpush2.msra.mxu0 0.0
    %1175 = vmatprep.subr.mxu0 0.0
    %1176 = vmatpush2.msra.mxu0 0.0
    %1177 = vmatprep.subr.mxu0 0.0
    %1178 = vmatpush2.msra.mxu0 0.0
    %1179 = vmatprep.subr.mxu0 0.0
    %1180 = vmatpush2.msra.mxu0 0.0
    %1181 = vmatprep.subr.mxu0 0.0
    %1182 = vmatpush2.msra.mxu0 0.0
    %1183 = vmatprep.mubr.f32.mxu0 0.0
    %1184 = vmatmul.mubr.f32.gmra.mxu0 %v1021
    %v1185 = vpop.f32.mrf.mxu0
    %v1186 = vadd.f32 0.0, %v1185
    %v1187 = vpop.f32.mrf.mxu0
    %v1188 = vadd.f32 0.0, %v1187
    %1189 = vmatprep.mubr.f32.mxu0 0.0
    %1190 = vmatmul.mubr.f32.gmra.mxu0 %v1022
    %v1191 = vpop.f32.mrf.mxu0
    %v1192 = vadd.f32 0.0, %v1191
    %v1193 = vpop.f32.mrf.mxu0
    %v1194 = vadd.f32 0.0, %v1193
    %1195 = vdwg.mxu0
    %1196 = vmatprep.subr.mxu0 0.0
    %1197 = vmatpush1.msra.mxu0 %v1118
    %1198 = vmatprep.subr.mxu0 0.0
    %1199 = vmatpush1.msra.mxu0 %v1115
    %1200 = vmatprep.subr.mxu0 0.0
    %1201 = vmatpush1.msra.mxu0 %v1112
    %1202 = vmatprep.subr.mxu0 0.0
    %1203 = vmatpush1.msra.mxu0 %v1109
    %1204 = vmatprep.subr.mxu0 0.0
    %1205 = vmatpush1.msra.mxu0 %v1106
    %1206 = vmatprep.subr.mxu0 0.0
    %1207 = vmatpush1.msra.mxu0 %v1103
    %1208 = vmatprep.subr.mxu0 0.0
    %1209 = vmatpush1.msra.mxu0 %v1100
    %1210 = vmatprep.subr.mxu0 0.0
    %1211 = vmatpush1.msra.mxu0 %v1097
    %1212 = vmatprep.subr.mxu0 0.0
    %1213 = vmatpush1.msra.mxu0 %v1094
    %1214 = vmatprep.subr.mxu0 0.0
    %1215 = vmatpush1.msra.mxu0 %v1091
    %1216 = vmatprep.subr.mxu0 0.0
    %1217 = vmatpush1.msra.mxu0 %v1088
    %1218 = vmatprep.subr.mxu0 0.0
    %1219 = vmatpush1.msra.mxu0 %v1085
    %1220 = vmatprep.subr.mxu0 0.0
    %1221 = vmatpush1.msra.mxu0 %v1082
    %1222 = vmatprep.subr.mxu0 0.0
    %1223 = vmatpush1.msra.mxu0 %v1079
    %1224 = vmatprep.subr.mxu0 0.0
    %1225 = vmatpush1.msra.mxu0 %v1076
    %1226 = vmatprep.subr.mxu0 0.0
    %1227 = vmatpush1.msra.mxu0 %v1073
    %1228 = vmatprep.subr.mxu0 0.0
    %1229 = vmatpush2.msra.mxu0 0.0
    %1230 = vmatprep.subr.mxu0 0.0
    %1231 = vmatpush2.msra.mxu0 0.0
    %1232 = vmatprep.subr.mxu0 0.0
    %1233 = vmatpush2.msra.mxu0 0.0
    %1234 = vmatprep.subr.mxu0 0.0
    %1235 = vmatpush2.msra.mxu0 0.0
    %1236 = vmatprep.subr.mxu0 0.0
    %1237 = vmatpush2.msra.mxu0 0.0
    %1238 = vmatprep.subr.mxu0 0.0
    %1239 = vmatpush2.msra.mxu0 0.0
    %1240 = vmatprep.subr.mxu0 0.0
    %1241 = vmatpush2.msra.mxu0 0.0
    %1242 = vmatprep.subr.mxu0 0.0
    %1243 = vmatpush2.msra.mxu0 0.0
    %1244 = vmatprep.subr.mxu0 0.0
    %1245 = vmatpush2.msra.mxu0 0.0
    %1246 = vmatprep.subr.mxu0 0.0
    %1247 = vmatpush2.msra.mxu0 0.0
    %1248 = vmatprep.subr.mxu0 0.0
    %1249 = vmatpush2.msra.mxu0 0.0
    %1250 = vmatprep.subr.mxu0 0.0
    %1251 = vmatpush2.msra.mxu0 0.0
    %1252 = vmatprep.subr.mxu0 0.0
    %1253 = vmatpush2.msra.mxu0 0.0
    %1254 = vmatprep.subr.mxu0 0.0
    %1255 = vmatpush2.msra.mxu0 0.0
    %1256 = vmatprep.subr.mxu0 0.0
    %1257 = vmatpush2.msra.mxu0 0.0
    %1258 = vmatprep.subr.mxu0 0.0
    %1259 = vmatpush2.msra.mxu0 0.0
    %1260 = vmatprep.mubr.f32.mxu0 0.0
    %1261 = vmatmul.mubr.f32.gmra.mxu0 %v1021
    %v1262 = vpop.f32.mrf.mxu0
    %v1263 = vadd.f32 0.0, %v1262
    %v1264 = vpop.f32.mrf.mxu0
    %1265 = vmatprep.mubr.f32.mxu0 0.0
    %1266 = vmatmul.mubr.f32.gmra.mxu0 %v1022
    %v1267 = vpop.f32.mrf.mxu0
    %v1268 = vadd.f32 0.0, %v1267
    %v1269 = vpop.f32.mrf.mxu0
    %1270 = vdwg.mxu0
    %1271 = vmatprep.subr.mxu0 %v1069
    %1272 = vmatpush1.msra.mxu0 %v1068
    %1273 = vmatprep.subr.mxu0 %v1066
    %1274 = vmatpush1.msra.mxu0 %v1065
    %1275 = vmatprep.subr.mxu0 %v1063
    %1276 = vmatpush1.msra.mxu0 %v1062
    %1277 = vmatprep.subr.mxu0 %v1060
    %1278 = vmatpush1.msra.mxu0 %v1059
    %1279 = vmatprep.subr.mxu0 %v1057
    %1280 = vmatpush1.msra.mxu0 %v1056
    %1281 = vmatprep.subr.mxu0 %v1054
    %1282 = vmatpush1.msra.mxu0 %v1053
    %1283 = vmatprep.subr.mxu0 %v1051
    %1284 = vmatpush1.msra.mxu0 %v1050
    %1285 = vmatprep.subr.mxu0 %v1048
    %1286 = vmatpush1.msra.mxu0 %v1047
    %1287 = vmatprep.subr.mxu0 %v1045
    %1288 = vmatpush1.msra.mxu0 %v1044
    %1289 = vmatprep.subr.mxu0 %v1042
    %1290 = vmatpush1.msra.mxu0 %v1041
    %1291 = vmatprep.subr.mxu0 %v1039
    %1292 = vmatpush1.msra.mxu0 %v1038
    %1293 = vmatprep.subr.mxu0 %v1036
    %1294 = vmatpush1.msra.mxu0 %v1035
    %1295 = vmatprep.subr.mxu0 %v1033
    %1296 = vmatpush1.msra.mxu0 %v1032
    %1297 = vmatprep.subr.mxu0 %v1030
    %1298 = vmatpush1.msra.mxu0 %v1029
    %1299 = vmatprep.subr.mxu0 %v1027
    %1300 = vmatpush1.msra.mxu0 %v1026
    %1301 = vmatprep.subr.mxu0 %v1024
    %1302 = vmatpush1.msra.mxu0 %v1023
    %1303 = vmatprep.subr.mxu0 0.0
    %1304 = vmatpush2.msra.mxu0 0.0
    %1305 = vmatprep.subr.mxu0 0.0
    %1306 = vmatpush2.msra.mxu0 0.0
    %1307 = vmatprep.subr.mxu0 0.0
    %1308 = vmatpush2.msra.mxu0 0.0
    %1309 = vmatprep.subr.mxu0 0.0
    %1310 = vmatpush2.msra.mxu0 0.0
    %1311 = vmatprep.subr.mxu0 0.0
    %1312 = vmatpush2.msra.mxu0 0.0
    %1313 = vmatprep.subr.mxu0 0.0
    %1314 = vmatpush2.msra.mxu0 0.0
    %1315 = vmatprep.subr.mxu0 0.0
    %1316 = vmatpush2.msra.mxu0 0.0
    %1317 = vmatprep.subr.mxu0 0.0
    %1318 = vmatpush2.msra.mxu0 0.0
    %1319 = vmatprep.subr.mxu0 0.0
    %1320 = vmatpush2.msra.mxu0 0.0
    %1321 = vmatprep.subr.mxu0 0.0
    %1322 = vmatpush2.msra.mxu0 0.0
    %1323 = vmatprep.subr.mxu0 0.0
    %1324 = vmatpush2.msra.mxu0 0.0
    %1325 = vmatprep.subr.mxu0 0.0
    %1326 = vmatpush2.msra.mxu0 0.0
    %1327 = vmatprep.subr.mxu0 0.0
    %1328 = vmatpush2.msra.mxu0 0.0
    %1329 = vmatprep.subr.mxu0 0.0
    %1330 = vmatpush2.msra.mxu0 0.0
    %1331 = vmatprep.subr.mxu0 0.0
    %1332 = vmatpush2.msra.mxu0 0.0
    %1333 = vmatprep.subr.mxu0 0.0
    %1334 = vmatpush2.msra.mxu0 0.0
    %1335 = vmatprep.mubr.f32.mxu0 0.0
    %1336 = vmatmul.mubr.f32.gmra.mxu0 %v865
    %v1337 = vpop.f32.mrf.mxu0
    %v1338 = vadd.f32 %v1186, %v1337
    %v1339 = vpop.f32.mrf.mxu0
    %v1340 = vadd.f32 %v1188, %v1339
    %1341 = vmatprep.mubr.f32.mxu0 0.0
    %1342 = vmatmul.mubr.f32.gmra.mxu0 %v866
    %v1343 = vpop.f32.mrf.mxu0
    %v1344 = vadd.f32 %v1192, %v1343
    %v1345 = vpop.f32.mrf.mxu0
    %v1346 = vadd.f32 %v1194, %v1345
    %1347 = vdwg.mxu0
    %1348 = vmatprep.subr.mxu0 0.0
    %1349 = vmatpush1.msra.mxu0 %v1070
    %1350 = vmatprep.subr.mxu0 0.0
    %1351 = vmatpush1.msra.mxu0 %v1067
    %1352 = vmatprep.subr.mxu0 0.0
    %1353 = vmatpush1.msra.mxu0 %v1064
    %1354 = vmatprep.subr.mxu0 0.0
    %1355 = vmatpush1.msra.mxu0 %v1061
    %1356 = vmatprep.subr.mxu0 0.0
    %1357 = vmatpush1.msra.mxu0 %v1058
    %1358 = vmatprep.subr.mxu0 0.0
    %1359 = vmatpush1.msra.mxu0 %v1055
    %1360 = vmatprep.subr.mxu0 0.0
    %1361 = vmatpush1.msra.mxu0 %v1052
    %1362 = vmatprep.subr.mxu0 0.0
    %1363 = vmatpush1.msra.mxu0 %v1049
    %1364 = vmatprep.subr.mxu0 0.0
    %1365 = vmatpush1.msra.mxu0 %v1046
    %1366 = vmatprep.subr.mxu0 0.0
    %1367 = vmatpush1.msra.mxu0 %v1043
    %1368 = vmatprep.subr.mxu0 0.0
    %1369 = vmatpush1.msra.mxu0 %v1040
    %1370 = vmatprep.subr.mxu0 0.0
    %1371 = vmatpush1.msra.mxu0 %v1037
    %1372 = vmatprep.subr.mxu0 0.0
    %1373 = vmatpush1.msra.mxu0 %v1034
    %1374 = vmatprep.subr.mxu0 0.0
    %1375 = vmatpush1.msra.mxu0 %v1031
    %1376 = vmatprep.subr.mxu0 0.0
    %1377 = vmatpush1.msra.mxu0 %v1028
    %1378 = vmatprep.subr.mxu0 0.0
    %1379 = vmatpush1.msra.mxu0 %v1025
    %1380 = vmatprep.subr.mxu0 0.0
    %1381 = vmatpush2.msra.mxu0 0.0
    %1382 = vmatprep.subr.mxu0 0.0
    %1383 = vmatpush2.msra.mxu0 0.0
    %1384 = vmatprep.subr.mxu0 0.0
    %1385 = vmatpush2.msra.mxu0 0.0
    %1386 = vmatprep.subr.mxu0 0.0
    %1387 = vmatpush2.msra.mxu0 0.0
    %1388 = vmatprep.subr.mxu0 0.0
    %1389 = vmatpush2.msra.mxu0 0.0
    %1390 = vmatprep.subr.mxu0 0.0
    %1391 = vmatpush2.msra.mxu0 0.0
    %1392 = vmatprep.subr.mxu0 0.0
    %1393 = vmatpush2.msra.mxu0 0.0
    %1394 = vmatprep.subr.mxu0 0.0
    %1395 = vmatpush2.msra.mxu0 0.0
    %1396 = vmatprep.subr.mxu0 0.0
    %1397 = vmatpush2.msra.mxu0 0.0
    %1398 = vmatprep.subr.mxu0 0.0
    %1399 = vmatpush2.msra.mxu0 0.0
    %1400 = vmatprep.subr.mxu0 0.0
    %1401 = vmatpush2.msra.mxu0 0.0
    %1402 = vmatprep.subr.mxu0 0.0
    %1403 = vmatpush2.msra.mxu0 0.0
    %1404 = vmatprep.subr.mxu0 0.0
    %1405 = vmatpush2.msra.mxu0 0.0
    %1406 = vmatprep.subr.mxu0 0.0
    %1407 = vmatpush2.msra.mxu0 0.0
    %1408 = vmatprep.subr.mxu0 0.0
    %1409 = vmatpush2.msra.mxu0 0.0
    %1410 = vmatprep.subr.mxu0 0.0
    %1411 = vmatpush2.msra.mxu0 0.0
    %1412 = vmatprep.mubr.f32.mxu0 0.0
    %1413 = vmatmul.mubr.f32.gmra.mxu0 %v865
    %v1414 = vpop.f32.mrf.mxu0
    %v1415 = vadd.f32 %v1263, %v1414
    %v1416 = vpop.f32.mrf.mxu0
    %1417 = vmatprep.mubr.f32.mxu0 0.0
    %1418 = vmatmul.mubr.f32.gmra.mxu0 %v866
    %v1419 = vpop.f32.mrf.mxu0
    %v1420 = vadd.f32 %v1268, %v1419
    %v1421 = vpop.f32.mrf.mxu0
    %1422 = vdwg.mxu0
    %v1424 = vlaneseq
    %v1425 = vshrl.u32 %v1424, 7
    %v1426 = vsub.s32 0, %v1425
    %v1427 = vrot.slane %v199, %v1426
    %v1428 = vlaneseq
    %v1429 = vshrl.u32 %v1428, 7
    %v1430 = vsub.s32 1, %v1429
    %v1431 = vrot.slane %v199, %v1430
    %v1432 = vlaneseq
    %v1433 = vshrl.u32 %v1432, 7
    %v1434 = vsub.s32 2, %v1433
    %v1435 = vrot.slane %v199, %v1434
    %v1439 = vadd.f32 %v1338, %v1427
    %v1440 = vadd.f32 %v1340, %v1431
    %v1441 = vadd.f32 %v1415, %v1435
    %v1442 = vadd.f32 %v1344, %v1427
    %v1443 = vadd.f32 %v1346, %v1431
    %v1444 = vadd.f32 %v1420, %v1435
    %v1445 = vld [vmem:[#allocation14] sm:$0xff]
    %v1446 = vld [vmem:[#allocation14 + $0x8] sm:$0xff]
    %v1447 = vld [vmem:[#allocation14 + $0x10] sm:$0xff]
    %v1448 = vld [vmem:[#allocation14 + $0x18] sm:$0xff]
    %v1449 = vld [vmem:[#allocation14 + $0x20] sm:$0xff]
    %v1450 = vld [vmem:[#allocation14 + $0x28] sm:$0xff]
    %v1451 = vld [vmem:[#allocation14 + $0x30] sm:$0xff]
    %v1452 = vld [vmem:[#allocation14 + $0x38] sm:$0xff]
    %v1453 = vld [vmem:[#allocation14 + $0x40] sm:$0xff]
    %v1454 = vld [vmem:[#allocation14 + $0x48] sm:$0xff]
    %v1455 = vld [vmem:[#allocation14 + $0x50] sm:$0xff]
    %v1456 = vld [vmem:[#allocation14 + $0x58] sm:$0xff]
    %v1457 = vld [vmem:[#allocation14 + $0x60] sm:$0xff]
    %v1458 = vld [vmem:[#allocation14 + $0x68] sm:$0xff]
    %v1459 = vld [vmem:[#allocation14 + $0x70] sm:$0xff]
    %v1460 = vld [vmem:[#allocation14 + $0x78] sm:$0xff]
    %v1461 = vld [vmem:[#allocation14 + $0x80] sm:$0xff]
    %v1462 = vld [vmem:[#allocation14 + $0x88] sm:$0xff]
    %v1463 = vld [vmem:[#allocation14 + $0x90] sm:$0xff]
    %v1464 = vld [vmem:[#allocation14 + $0x98] sm:$0xff]
    %v1465 = vld [vmem:[#allocation14 + $0xa0] sm:$0xff]
    %v1466 = vld [vmem:[#allocation14 + $0xa8] sm:$0xff]
    %v1467 = vld [vmem:[#allocation14 + $0xb0] sm:$0xff]
    %v1468 = vld [vmem:[#allocation14 + $0xb8] sm:$0xff]
    %v1469 = vld [vmem:[#allocation14 + $0xc0] sm:$0xff]
    %v1470 = vld [vmem:[#allocation14 + $0xc8] sm:$0xff]
    %v1471 = vld [vmem:[#allocation14 + $0xd0] sm:$0xff]
    %v1472 = vld [vmem:[#allocation14 + $0xd8] sm:$0xff]
    %v1473 = vld [vmem:[#allocation14 + $0xe0] sm:$0xff]
    %v1474 = vld [vmem:[#allocation14 + $0xe8] sm:$0xff]
    %v1475 = vld [vmem:[#allocation14 + $0xf0] sm:$0xff]
    %v1476 = vld [vmem:[#allocation14 + $0xf8] sm:$0xff]
    %v1477 = vld [vmem:[#allocation14 + $0x100] sm:$0xff]
    %v1478 = vld [vmem:[#allocation14 + $0x108] sm:$0xff]
    %v1479 = vld [vmem:[#allocation14 + $0x110] sm:$0xff]
    %v1480 = vld [vmem:[#allocation14 + $0x118] sm:$0xff]
    %v1481 = vld [vmem:[#allocation14 + $0x120] sm:$0xff]
    %v1482 = vld [vmem:[#allocation14 + $0x128] sm:$0xff]
    %v1483 = vld [vmem:[#allocation14 + $0x130] sm:$0xff]
    %v1484 = vld [vmem:[#allocation14 + $0x138] sm:$0xff]
    %v1485 = vld [vmem:[#allocation14 + $0x140] sm:$0xff]
    %v1486 = vld [vmem:[#allocation14 + $0x148] sm:$0xff]
    %v1487 = vld [vmem:[#allocation14 + $0x150] sm:$0xff]
    %v1488 = vld [vmem:[#allocation14 + $0x158] sm:$0xff]
    %v1489 = vld [vmem:[#allocation14 + $0x160] sm:$0xff]
    %v1490 = vld [vmem:[#allocation14 + $0x168] sm:$0xff]
    %v1491 = vld [vmem:[#allocation14 + $0x170] sm:$0xff]
    %v1492 = vld [vmem:[#allocation14 + $0x178] sm:$0xff]
    %v1494 = vlaneseq
    %v1495 = vshrl.u32 %v1494, 7
    %v1496 = vsub.s32 0, %v1495
    %v1497 = vrot.slane %v200, %v1496
    %v1498 = vlaneseq
    %v1499 = vshrl.u32 %v1498, 7
    %v1500 = vsub.s32 1, %v1499
    %v1501 = vrot.slane %v200, %v1500
    %v1502 = vlaneseq
    %v1503 = vshrl.u32 %v1502, 7
    %v1504 = vsub.s32 2, %v1503
    %v1505 = vrot.slane %v200, %v1504
    %1509 = vmatprep.subr.mxu0 %v1491
    %1510 = vmatpush1.msra.mxu0 %v1490
    %1511 = vmatprep.subr.mxu0 %v1488
    %1512 = vmatpush1.msra.mxu0 %v1487
    %1513 = vmatprep.subr.mxu0 %v1485
    %1514 = vmatpush1.msra.mxu0 %v1484
    %1515 = vmatprep.subr.mxu0 %v1482
    %1516 = vmatpush1.msra.mxu0 %v1481
    %1517 = vmatprep.subr.mxu0 %v1479
    %1518 = vmatpush1.msra.mxu0 %v1478
    %1519 = vmatprep.subr.mxu0 %v1476
    %1520 = vmatpush1.msra.mxu0 %v1475
    %1521 = vmatprep.subr.mxu0 %v1473
    %1522 = vmatpush1.msra.mxu0 %v1472
    %1523 = vmatprep.subr.mxu0 %v1470
    %1524 = vmatpush1.msra.mxu0 %v1469
    %1525 = vmatprep.subr.mxu0 %v1467
    %1526 = vmatpush1.msra.mxu0 %v1466
    %1527 = vmatprep.subr.mxu0 %v1464
    %1528 = vmatpush1.msra.mxu0 %v1463
    %1529 = vmatprep.subr.mxu0 %v1461
    %1530 = vmatpush1.msra.mxu0 %v1460
    %1531 = vmatprep.subr.mxu0 %v1458
    %1532 = vmatpush1.msra.mxu0 %v1457
    %1533 = vmatprep.subr.mxu0 %v1455
    %1534 = vmatpush1.msra.mxu0 %v1454
    %1535 = vmatprep.subr.mxu0 %v1452
    %1536 = vmatpush1.msra.mxu0 %v1451
    %1537 = vmatprep.subr.mxu0 %v1449
    %1538 = vmatpush1.msra.mxu0 %v1448
    %1539 = vmatprep.subr.mxu0 %v1446
    %1540 = vmatpush1.msra.mxu0 %v1445
    %1541 = vmatprep.subr.mxu0 0.0
    %1542 = vmatpush2.msra.mxu0 0.0
    %1543 = vmatprep.subr.mxu0 0.0
    %1544 = vmatpush2.msra.mxu0 0.0
    %1545 = vmatprep.subr.mxu0 0.0
    %1546 = vmatpush2.msra.mxu0 0.0
    %1547 = vmatprep.subr.mxu0 0.0
    %1548 = vmatpush2.msra.mxu0 0.0
    %1549 = vmatprep.subr.mxu0 0.0
    %1550 = vmatpush2.msra.mxu0 0.0
    %1551 = vmatprep.subr.mxu0 0.0
    %1552 = vmatpush2.msra.mxu0 0.0
    %1553 = vmatprep.subr.mxu0 0.0
    %1554 = vmatpush2.msra.mxu0 0.0
    %1555 = vmatprep.subr.mxu0 0.0
    %1556 = vmatpush2.msra.mxu0 0.0
    %1557 = vmatprep.subr.mxu0 0.0
    %1558 = vmatpush2.msra.mxu0 0.0
    %1559 = vmatprep.subr.mxu0 0.0
    %1560 = vmatpush2.msra.mxu0 0.0
    %1561 = vmatprep.subr.mxu0 0.0
    %1562 = vmatpush2.msra.mxu0 0.0
    %1563 = vmatprep.subr.mxu0 0.0
    %1564 = vmatpush2.msra.mxu0 0.0
    %1565 = vmatprep.subr.mxu0 0.0
    %1566 = vmatpush2.msra.mxu0 0.0
    %1567 = vmatprep.subr.mxu0 0.0
    %1568 = vmatpush2.msra.mxu0 0.0
    %1569 = vmatprep.subr.mxu0 0.0
    %1570 = vmatpush2.msra.mxu0 0.0
    %1571 = vmatprep.subr.mxu0 0.0
    %1572 = vmatpush2.msra.mxu0 0.0
    %1573 = vmatprep.mubr.f32.mxu0 0.0
    %1574 = vmatmul.mubr.f32.gmra.mxu0 %v516
    %v1575 = vpop.f32.mrf.mxu0
    %v1576 = vadd.f32 %v1497, %v1575
    %v1577 = vpop.f32.mrf.mxu0
    %v1578 = vadd.f32 %v1501, %v1577
    %1579 = vmatprep.mubr.f32.mxu0 0.0
    %1580 = vmatmul.mubr.f32.gmra.mxu0 %v517
    %v1581 = vpop.f32.mrf.mxu0
    %v1582 = vadd.f32 %v1497, %v1581
    %v1583 = vpop.f32.mrf.mxu0
    %v1584 = vadd.f32 %v1501, %v1583
    %1585 = vdwg.mxu0
    %1586 = vmatprep.subr.mxu0 0.0
    %1587 = vmatpush1.msra.mxu0 %v1492
    %1588 = vmatprep.subr.mxu0 0.0
    %1589 = vmatpush1.msra.mxu0 %v1489
    %1590 = vmatprep.subr.mxu0 0.0
    %1591 = vmatpush1.msra.mxu0 %v1486
    %1592 = vmatprep.subr.mxu0 0.0
    %1593 = vmatpush1.msra.mxu0 %v1483
    %1594 = vmatprep.subr.mxu0 0.0
    %1595 = vmatpush1.msra.mxu0 %v1480
    %1596 = vmatprep.subr.mxu0 0.0
    %1597 = vmatpush1.msra.mxu0 %v1477
    %1598 = vmatprep.subr.mxu0 0.0
    %1599 = vmatpush1.msra.mxu0 %v1474
    %1600 = vmatprep.subr.mxu0 0.0
    %1601 = vmatpush1.msra.mxu0 %v1471
    %1602 = vmatprep.subr.mxu0 0.0
    %1603 = vmatpush1.msra.mxu0 %v1468
    %1604 = vmatprep.subr.mxu0 0.0
    %1605 = vmatpush1.msra.mxu0 %v1465
    %1606 = vmatprep.subr.mxu0 0.0
    %1607 = vmatpush1.msra.mxu0 %v1462
    %1608 = vmatprep.subr.mxu0 0.0
    %1609 = vmatpush1.msra.mxu0 %v1459
    %1610 = vmatprep.subr.mxu0 0.0
    %1611 = vmatpush1.msra.mxu0 %v1456
    %1612 = vmatprep.subr.mxu0 0.0
    %1613 = vmatpush1.msra.mxu0 %v1453
    %1614 = vmatprep.subr.mxu0 0.0
    %1615 = vmatpush1.msra.mxu0 %v1450
    %1616 = vmatprep.subr.mxu0 0.0
    %1617 = vmatpush1.msra.mxu0 %v1447
    %1618 = vmatprep.subr.mxu0 0.0
    %1619 = vmatpush2.msra.mxu0 0.0
    %1620 = vmatprep.subr.mxu0 0.0
    %1621 = vmatpush2.msra.mxu0 0.0
    %1622 = vmatprep.subr.mxu0 0.0
    %1623 = vmatpush2.msra.mxu0 0.0
    %1624 = vmatprep.subr.mxu0 0.0
    %1625 = vmatpush2.msra.mxu0 0.0
    %1626 = vmatprep.subr.mxu0 0.0
    %1627 = vmatpush2.msra.mxu0 0.0
    %1628 = vmatprep.subr.mxu0 0.0
    %1629 = vmatpush2.msra.mxu0 0.0
    %1630 = vmatprep.subr.mxu0 0.0
    %1631 = vmatpush2.msra.mxu0 0.0
    %1632 = vmatprep.subr.mxu0 0.0
    %1633 = vmatpush2.msra.mxu0 0.0
    %1634 = vmatprep.subr.mxu0 0.0
    %1635 = vmatpush2.msra.mxu0 0.0
    %1636 = vmatprep.subr.mxu0 0.0
    %1637 = vmatpush2.msra.mxu0 0.0
    %1638 = vmatprep.subr.mxu0 0.0
    %1639 = vmatpush2.msra.mxu0 0.0
    %1640 = vmatprep.subr.mxu0 0.0
    %1641 = vmatpush2.msra.mxu0 0.0
    %1642 = vmatprep.subr.mxu0 0.0
    %1643 = vmatpush2.msra.mxu0 0.0
    %1644 = vmatprep.subr.mxu0 0.0
    %1645 = vmatpush2.msra.mxu0 0.0
    %1646 = vmatprep.subr.mxu0 0.0
    %1647 = vmatpush2.msra.mxu0 0.0
    %1648 = vmatprep.subr.mxu0 0.0
    %1649 = vmatpush2.msra.mxu0 0.0
    %1650 = vmatprep.mubr.f32.mxu0 0.0
    %1651 = vmatmul.mubr.f32.gmra.mxu0 %v516
    %v1652 = vpop.f32.mrf.mxu0
    %v1653 = vadd.f32 %v1505, %v1652
    %v1654 = vpop.f32.mrf.mxu0
    %1655 = vmatprep.mubr.f32.mxu0 0.0
    %1656 = vmatmul.mubr.f32.gmra.mxu0 %v517
    %v1657 = vpop.f32.mrf.mxu0
    %v1658 = vadd.f32 %v1505, %v1657
    %v1659 = vpop.f32.mrf.mxu0
    %1660 = vdwg.mxu0
    %v1661 = vadd.f32 %v1439, %v333
    %v1662 = vadd.f32 %v1442, %v339
    %v1663 = vadd.f32 %v1661, %v1576
    %v1664 = vadd.f32 %v1662, %v1582
    %v1665 = vxor.u32 %v1663, 2147483648
    %v1666 = vxor.u32 %v1664, 2147483648
    %v1667 = vmul.f32 %v1665, 1.442695
    %v1668 = vpow.pop %v1667
    %v1669 = vmul.f32 %v1666, 1.442695
    %v1670 = vpow.pop %v1669
    %v1671 = vadd.f32 %v1668, 1.0
    %v1672 = vadd.f32 %v1670, 1.0
    %v1673 = vrcp.pop %v1671
    %v1674 = vmul.f32 1.0, %v1673
    %v1675 = vrcp.pop %v1672
    %v1676 = vmul.f32 1.0, %v1675
    %v1677 = vadd.f32 %v1440, %v335
    %v1678 = vadd.f32 %v1443, %v341
    %v1679 = vadd.f32 %v1677, %v1578
    %v1680 = vadd.f32 %v1678, %v1584
    %v1681 = vxor.u32 %v1679, 2147483648
    %v1682 = vxor.u32 %v1680, 2147483648
    %v1683 = vmul.f32 %v1681, 1.442695
    %v1684 = vpow.pop %v1683
    %v1685 = vmul.f32 %v1682, 1.442695
    %v1686 = vpow.pop %v1685
    %v1687 = vadd.f32 %v1684, 1.0
    %v1688 = vadd.f32 %v1686, 1.0
    %v1689 = vrcp.pop %v1687
    %v1690 = vmul.f32 1.0, %v1689
    %v1691 = vrcp.pop %v1688
    %v1692 = vmul.f32 1.0, %v1691
    %v1693 = vadd.f32 %v1441, %v410
    %v1694 = vadd.f32 %v1444, %v415
    %v1695 = vmul.f32 %v1674, %v1653
    %v1696 = vmul.f32 %v1676, %v1658
    %v1697 = vadd.f32 %v1693, %v1695
    %v1698 = vadd.f32 %v1694, %v1696
    %v1699 = vtanh.pop %v1697
    %v1700 = vtanh.pop %v1698
    %v1701 = vsub.f32 %v516, %v1699
    %v1702 = vsub.f32 %v517, %v1700
    %v1703 = vmul.f32 %v1690, %v1701
    %v1704 = vmul.f32 %v1692, %v1702
    %v1705 = vadd.f32 %v1699, %v1703
    %v1706 = vadd.f32 %v1700, %v1704
    %v1707 = vld [vmem:[#allocation17] sm:$0xff]
    %v1708 = vld [vmem:[#allocation17 + $0x8] sm:$0xff]
    %v1709 = vld [vmem:[#allocation17 + $0x10] sm:$0xff]
    %v1710 = vld [vmem:[#allocation17 + $0x18] sm:$0xff]
    %v1711 = vld [vmem:[#allocation17 + $0x20] sm:$0xff]
    %v1712 = vld [vmem:[#allocation17 + $0x28] sm:$0xff]
    %v1713 = vld [vmem:[#allocation17 + $0x30] sm:$0xff]
    %v1714 = vld [vmem:[#allocation17 + $0x38] sm:$0xff]
    %v1715 = vld [vmem:[#allocation17 + $0x40] sm:$0xff]
    %v1716 = vld [vmem:[#allocation17 + $0x48] sm:$0xff]
    %v1717 = vld [vmem:[#allocation17 + $0x50] sm:$0xff]
    %v1718 = vld [vmem:[#allocation17 + $0x58] sm:$0xff]
    %v1719 = vld [vmem:[#allocation17 + $0x60] sm:$0xff]
    %v1720 = vld [vmem:[#allocation17 + $0x68] sm:$0xff]
    %v1721 = vld [vmem:[#allocation17 + $0x70] sm:$0xff]
    %v1722 = vld [vmem:[#allocation17 + $0x78] sm:$0xff]
    %1723 = vmatprep.subr.mxu0 0.0
    %1724 = vmatpush1.msra.mxu0 %v1722
    %1725 = vmatprep.subr.mxu0 0.0
    %1726 = vmatpush1.msra.mxu0 %v1721
    %1727 = vmatprep.subr.mxu0 0.0
    %1728 = vmatpush1.msra.mxu0 %v1720
    %1729 = vmatprep.subr.mxu0 0.0
    %1730 = vmatpush1.msra.mxu0 %v1719
    %1731 = vmatprep.subr.mxu0 0.0
    %1732 = vmatpush1.msra.mxu0 %v1718
    %1733 = vmatprep.subr.mxu0 0.0
    %1734 = vmatpush1.msra.mxu0 %v1717
    %1735 = vmatprep.subr.mxu0 0.0
    %1736 = vmatpush1.msra.mxu0 %v1716
    %1737 = vmatprep.subr.mxu0 0.0
    %1738 = vmatpush1.msra.mxu0 %v1715
    %1739 = vmatprep.subr.mxu0 0.0
    %1740 = vmatpush1.msra.mxu0 %v1714
    %1741 = vmatprep.subr.mxu0 0.0
    %1742 = vmatpush1.msra.mxu0 %v1713
    %1743 = vmatprep.subr.mxu0 0.0
    %1744 = vmatpush1.msra.mxu0 %v1712
    %1745 = vmatprep.subr.mxu0 0.0
    %1746 = vmatpush1.msra.mxu0 %v1711
    %1747 = vmatprep.subr.mxu0 0.0
    %1748 = vmatpush1.msra.mxu0 %v1710
    %1749 = vmatprep.subr.mxu0 0.0
    %1750 = vmatpush1.msra.mxu0 %v1709
    %1751 = vmatprep.subr.mxu0 0.0
    %1752 = vmatpush1.msra.mxu0 %v1708
    %1753 = vmatprep.subr.mxu0 0.0
    %1754 = vmatpush1.msra.mxu0 %v1707
    %1755 = vmatprep.subr.mxu0 0.0
    %1756 = vmatpush2.msra.mxu0 0.0
    %1757 = vmatprep.subr.mxu0 0.0
    %1758 = vmatpush2.msra.mxu0 0.0
    %1759 = vmatprep.subr.mxu0 0.0
    %1760 = vmatpush2.msra.mxu0 0.0
    %1761 = vmatprep.subr.mxu0 0.0
    %1762 = vmatpush2.msra.mxu0 0.0
    %1763 = vmatprep.subr.mxu0 0.0
    %1764 = vmatpush2.msra.mxu0 0.0
    %1765 = vmatprep.subr.mxu0 0.0
    %1766 = vmatpush2.msra.mxu0 0.0
    %1767 = vmatprep.subr.mxu0 0.0
    %1768 = vmatpush2.msra.mxu0 0.0
    %1769 = vmatprep.subr.mxu0 0.0
    %1770 = vmatpush2.msra.mxu0 0.0
    %1771 = vmatprep.subr.mxu0 0.0
    %1772 = vmatpush2.msra.mxu0 0.0
    %1773 = vmatprep.subr.mxu0 0.0
    %1774 = vmatpush2.msra.mxu0 0.0
    %1775 = vmatprep.subr.mxu0 0.0
    %1776 = vmatpush2.msra.mxu0 0.0
    %1777 = vmatprep.subr.mxu0 0.0
    %1778 = vmatpush2.msra.mxu0 0.0
    %1779 = vmatprep.subr.mxu0 0.0
    %1780 = vmatpush2.msra.mxu0 0.0
    %1781 = vmatprep.subr.mxu0 0.0
    %1782 = vmatpush2.msra.mxu0 0.0
    %1783 = vmatprep.subr.mxu0 0.0
    %1784 = vmatpush2.msra.mxu0 0.0
    %1785 = vmatprep.subr.mxu0 0.0
    %1786 = vmatpush2.msra.mxu0 0.0
    %1787 = vmatprep.mubr.f32.mxu0 0.0
    %1788 = vmatmul.mubr.f32.gmra.mxu0 %v1705
    %v1789 = vpop.f32.mrf.mxu0
    %v1790 = vadd.f32 %v508, %v1789
    %v1791 = vpop.f32.mrf.mxu0
    %1792 = vmatprep.mubr.f32.mxu0 0.0
    %1793 = vmatmul.mubr.f32.gmra.mxu0 %v1706
    %v1794 = vpop.f32.mrf.mxu0
    %v1795 = vadd.f32 %v513, %v1794
    %v1796 = vpop.f32.mrf.mxu0
    %1797 = vdwg.mxu0
    %1798 = vst [vmem:[#allocation19] sm:$0xff] %v1790
    %1799 = vst [vmem:[#allocation19 + $0x8] sm:$0xff] %v1795
    // Predicated region
    $region110: #{tpu_custom_call.1} parent=1 // pred_check
      _
    $region111: #{tpu_custom_call.1} parent=1 // pred_check_branch
      %1801 = sbr.rel (0) target = $region113
    $region112: #{tpu_custom_call.1} parent=1 // pred_region
      %s1803 = ssub.s32 256, 256
      %1804 = vsyncadd [#allocation4], %s1803
      %s1805 = sshll.u32 [#allocation19], 4
      %s1806 = int_to_ptr.vmem [resolvable:$true] %s1805
      %1811 = dma.vmem_to_hbm [thread:$0]  %s1806, 256, %s17, [#allocation4], 128, 128, 8
    $region113: #{tpu_custom_call.1} parent=1 // pred_fallthru
      _
    // Predicated region
    $region114: #{tpu_custom_call.1} parent=1 // pred_check
      _
    $region115: #{tpu_custom_call.1} parent=1 // pred_check_branch
      %1813 = sbr.rel (0) target = $region117
    $region116: #{tpu_custom_call.1} parent=1 // pred_region
      %1814 = dma.done [#allocation4], 256
    $region117: #{tpu_custom_call.1} parent=1 // pred_fallthru
      _
    %1815 = vsyncpa [#allocation3], 1
    %1816 = vsyncpa [#allocation6], 1
    %1817 = vsyncpa [#allocation9], 1
    %1818 = vsyncpa [#allocation12], 1
    %1819 = vsyncpa [#allocation15], 1
    %1820 = vsyncpa [#allocation18], 1
    %1821 = vsyncpa [#allocation4], 1

</llo_original>
